<compile_context>
chip_gen: v6e
topology: v6e:2x2x1
jax: 0.10.0
libtpu: 0.0.40
codegen_flags: <defaults>
</compile_context>

<pallas_src>
import jax
import jax.numpy as jnp
from jax.experimental import pallas as pl
from jax.experimental.pallas import tpu as pltpu


def _softmax_kernel(x_ref, wt_ref, b_ref, o_ref):
    # logits = x @ W^T + b   (weight is stored pre-transposed as (in, out))
    x = x_ref[...].astype(wt_ref.dtype)
    logits = jnp.dot(x, wt_ref[...], preferred_element_type=jnp.float32)
    logits = logits + b_ref[...]          # (1, out) broadcasts over rows, f32

    # Numerically-stable log_softmax over the last dim, all f32.
    m = jnp.max(logits, axis=-1, keepdims=True)
    # min(., 0) is a no-op for valid rows (logits - m <= 0 by construction) but
    # keeps exp() finite on the undefined padded rows of a partial last tile.
    shifted = jnp.minimum(logits - m, 0.0)
    lse = jnp.log(jnp.sum(jnp.exp(shifted), axis=-1, keepdims=True))
    o_ref[...] = (shifted - lse).astype(o_ref.dtype)


def prepare_params(weight, bias, matmul_dtype=jnp.float32):
    """One-time parameter prep (do NOT call per forward).

    weight: (output_size, input_size) f32 (PyTorch nn.Linear layout)
    bias:   (output_size,) f32
    returns wt (input_size, output_size) in `matmul_dtype`, bias2d (1, output_size) f32.

    matmul_dtype=jnp.float32 matches the PyTorch reference exactly and costs
    nothing here (the kernel is HBM-bound); pass jnp.bfloat16 to use the bf16
    MXU fast path if a small precision delta is acceptable.
    """
    out_size, in_size = weight.shape
    wt = jnp.asarray(weight).T.astype(matmul_dtype)            # (in, out)
    b2 = jnp.asarray(bias, jnp.float32).reshape(1, out_size)   # keep 2-D for TPU
    return wt, b2


def _pick_batch_tile(B, max_tb=4096):
    """Batch tile: biggest block <= max_tb; for large B, an even step count."""
    if B <= max_tb:
        return B
    n_steps = pl.cdiv(B, max_tb)
    if n_steps % 2:
        n_steps += 1                      # even steps -> balanced on v7x's 2 TCs
    tb = pl.cdiv(B, n_steps)
    return ((tb + 7) // 8) * 8            # multiple of 8 (sublane constraint)


def softmax_forward(x, wt, bias2d, batch_size=None, *,
                    out_dtype=jnp.float32, min_pallas_rows=256, max_tb=4096):
    """Pallas equivalent of SoftMax.forward(inp_var, batch_size).

    x:      (..., input_size) float32
    wt:     (input_size, output_size) (prepared by prepare_params)
    bias2d: (1, output_size) float32
    returns (..., output_size) log-probabilities in `out_dtype`.
    """
    del batch_size  # unused by the reference forward as well
    orig_shape = x.shape
    in_size, out_size = wt.shape
    assert orig_shape[-1] == in_size
    x2 = x.reshape(-1, in_size)
    B = x2.shape[0]

    # Small-batch fallback: a pallas_call is pure launch overhead at this size;
    # let XLA fuse the matmul + log_softmax with surrounding ops.
    if B < min_pallas_rows:
        logits = jnp.dot(x2.astype(wt.dtype), wt,
                         preferred_element_type=jnp.float32) + bias2d
        out = jax.nn.log_softmax(logits, axis=-1).astype(out_dtype)
        return out.reshape(*orig_shape[:-1], out_size)

    TB = _pick_batch_tile(B, max_tb)
    grid = (pl.cdiv(B, TB),)

    out_itemsize = jnp.dtype(out_dtype).itemsize
    cost = pl.CostEstimate(
        flops=2 * B * in_size * out_size + 5 * B * out_size,
        transcendentals=B * out_size + B,          # exp per element + log per row
        bytes_accessed=(x2.size * x2.dtype.itemsize
                        + wt.size * wt.dtype.itemsize
                        + bias2d.size * 4
                        + B * out_size * out_itemsize),
    )

    out = pl.pallas_call(
        _softmax_kernel,
        out_shape=jax.ShapeDtypeStruct((B, out_size), out_dtype),
        grid=grid,
        in_specs=[
            pl.BlockSpec((TB, in_size), lambda i: (i, 0)),        # batch-tiled x
            pl.BlockSpec((in_size, out_size), lambda i: (0, 0)),  # resident weight
            pl.BlockSpec((1, out_size), lambda i: (0, 0)),        # resident bias
        ],
        out_specs=pl.BlockSpec((TB, out_size), lambda i: (i, 0)),
        compiler_params=pltpu.CompilerParams(
            dimension_semantics=("parallel",),     # 2 TCs on v7x; no-op on v5e/v6e
        ),
        cost_estimate=cost,
    )(x2, wt, bias2d)

    return out.reshape(*orig_shape[:-1], out_size)


if __name__ == "__main__":
    # Module config: SoftMax(input_size=32, output_size=128)
    input_size = 32
    output_size = 128

    key = jax.random.PRNGKey(0)
    kx_small, kx_big, kw, kb = jax.random.split(key, 4)

    # deterministic synthetic "parameters" (nn.Linear layout: (out, in))
    bound = 1.0 / (input_size ** 0.5)
    weight = jax.random.uniform(
        kw, (output_size, input_size), jnp.float32, -bound, bound
    )
    bias = jax.random.uniform(kb, (output_size,), jnp.float32, -bound, bound)

    # One-time parameter prep (transpose happens here, not per call).
    wt, b2 = prepare_params(weight, bias)          # f32 matmul (matches reference)

    def ref_log_softmax(inp):
        return jax.nn.log_softmax(inp @ weight.T + bias, axis=-1)

    # --- 1) small batch: exercises the XLA fallback path ------------------
    x_small = jax.random.normal(kx_small, (8, input_size), jnp.float32)
    out_small = jax.block_until_ready(softmax_forward(x_small, wt, b2, batch_size=8))
    assert out_small.shape == (8, output_size)
    assert jnp.allclose(out_small, ref_log_softmax(x_small), atol=1e-5, rtol=1e-5)

    # --- 2) moderate 3-D batch: exercises the Pallas kernel path -----------
    # (8, 128, 32) -> 1024 rows of 32 features; above min_pallas_rows.
    x_big = jax.random.normal(kx_big, (8, 128, input_size), jnp.float32)
    out_big = jax.block_until_ready(
        softmax_forward(x_big, wt, b2, batch_size=8 * 128)
    )
    assert out_big.shape == (8, 128, output_size)
    assert jnp.allclose(out_big, ref_log_softmax(x_big), atol=1e-5, rtol=1e-5)

    # rows of exp(log_softmax) must sum to 1
    assert jnp.allclose(jnp.sum(jnp.exp(out_big), axis=-1), 1.0, atol=1e-4)
    assert jnp.allclose(jnp.sum(jnp.exp(out_small), axis=-1), 1.0, atol=1e-4)

    print("KERNEL_OK")
</pallas_src>

<mosaic_0001>
module attributes {stable_mosaic.version = 11 : i64} {
  func.func @_softmax_kernel(%arg0: i32, %arg1: memref<1024x32xf32, #tpu.memory_space<vmem>>, %arg2: memref<32x128xf32, #tpu.memory_space<vmem>>, %arg3: memref<1x128xf32, #tpu.memory_space<vmem>>, %arg4: memref<1024x128xf32, #tpu.memory_space<vmem>>) attributes {dimension_semantics = [#tpu.dimension_semantics<parallel>], iteration_bounds = array<i64: 1>, scalar_prefetch = 0 : i64, scratch_operands = 0 : i64, tpu.core_type = #tpu.core_type<tc>, window_params = [{transform_indices = @transform_0, window_bounds = array<i64: 1024, 32>}, {pipeline_mode = #tpu.pipeline_mode<synchronous>, transform_indices = @transform_1, window_bounds = array<i64: 32, 128>}, {pipeline_mode = #tpu.pipeline_mode<synchronous>, transform_indices = @transform_2, window_bounds = array<i64: 1, 128>}, {transform_indices = @transform_3, window_bounds = array<i64: 1024, 128>}]} {
    %c0 = arith.constant 0 : index
    %c0_0 = arith.constant 0 : index
    %0 = vector.load %arg1[%c0, %c0_0] : memref<1024x32xf32, #tpu.memory_space<vmem>>, vector<1024x32xf32>
    %c0_1 = arith.constant 0 : index
    %c0_2 = arith.constant 0 : index
    %1 = vector.load %arg2[%c0_1, %c0_2] : memref<32x128xf32, #tpu.memory_space<vmem>>, vector<32x128xf32>
    %cst = arith.constant dense<0.000000e+00> : vector<1024x128xf32>
    %2 = tpu.matmul %0, %1, %cst {dimension_numbers = #tpu.dot_dimension_numbers<[1], [0], [0], [1], [0, 0, 1, 1], [], []>} : vector<1024x32xf32>, vector<32x128xf32>, vector<1024x128xf32> -> vector<1024x128xf32>
    %c0_3 = arith.constant 0 : index
    %c0_4 = arith.constant 0 : index
    %3 = vector.load %arg3[%c0_3, %c0_4] : memref<1x128xf32, #tpu.memory_space<vmem>>, vector<1x128xf32>
    %4 = vector.broadcast %3 : vector<1x128xf32> to vector<1024x128xf32>
    %5 = arith.addf %2, %4 : vector<1024x128xf32>
    %cst_5 = arith.constant dense<0xFF800000> : vector<1024xf32>
    %6 = vector.multi_reduction <maximumf>, %5, %cst_5 [1] : vector<1024x128xf32> to vector<1024xf32>
    %7 = vector.shape_cast %6 : vector<1024xf32> to vector<1024x1xf32>
    %8 = vector.broadcast %7 : vector<1024x1xf32> to vector<1024x128xf32>
    %9 = arith.subf %5, %8 : vector<1024x128xf32>
    %cst_6 = arith.constant 0.000000e+00 : f32
    %10 = vector.broadcast %cst_6 : f32 to vector<1024x128xf32>
    %11 = arith.minimumf %9, %10 : vector<1024x128xf32>
    %12 = math.exp %11 : vector<1024x128xf32>
    %cst_7 = arith.constant dense<0.000000e+00> : vector<1024xf32>
    %13 = vector.multi_reduction <add>, %12, %cst_7 [1] : vector<1024x128xf32> to vector<1024xf32>
    %14 = vector.shape_cast %13 : vector<1024xf32> to vector<1024x1xf32>
    %15 = math.log %14 : vector<1024x1xf32>
    %16 = vector.broadcast %15 : vector<1024x1xf32> to vector<1024x128xf32>
    %17 = arith.subf %11, %16 : vector<1024x128xf32>
    %c0_8 = arith.constant 0 : index
    %c0_9 = arith.constant 0 : index
    %18 = vector.load %arg4[%c0_8, %c0_9] : memref<1024x128xf32, #tpu.memory_space<vmem>>, vector<1024x128xf32>
    tpu.vector_store %arg4[%c0_8, %c0_9], %17 {strides = array<i32>} : memref<1024x128xf32, #tpu.memory_space<vmem>>, vector<1024x128xf32>,
    return
  }
  func.func @transform_0(%arg0: i32) -> (i32, i32) {
    %c0_i32 = arith.constant 0 : i32
    %c0_i32_0 = arith.constant 0 : i32
    return %arg0, %c0_i32 : i32, i32
  }
  func.func @transform_1(%arg0: i32) -> (i32, i32) {
    %c0_i32 = arith.constant 0 : i32
    %c0_i32_0 = arith.constant 0 : i32
    %c0_i32_1 = arith.constant 0 : i32
    return %c0_i32, %c0_i32_0 : i32, i32
  }
  func.func @transform_2(%arg0: i32) -> (i32, i32) {
    %c0_i32 = arith.constant 0 : i32
    %c0_i32_0 = arith.constant 0 : i32
    %c0_i32_1 = arith.constant 0 : i32
    return %c0_i32, %c0_i32_0 : i32, i32
  }
  func.func @transform_3(%arg0: i32) -> (i32, i32) {
    %c0_i32 = arith.constant 0 : i32
    %c0_i32_0 = arith.constant 0 : i32
    return %arg0, %c0_i32 : i32, i32
  }
}

</mosaic_0001>

<llo_original>
// kernel: tpu_custom_call.1
$region0: #{tpu_custom_call.1}
  #allocation0 [shape = 'u32[]', space=smem, size = 0x4, offset = 0x4, fixed_abs, tag = 'smem constant byte address 0x4 - core index']
  #allocation1 [shape = 'u32[144,128]{1,0:T(1,128)}', space=vmem, size = 0x12000, scoped, tag = 'internal scratch']
  %s0 = inlined_call_operand.vmem [shape: f32[1024,32], index: 0, kind: input, shape index: {}]
  %s1 = inlined_call_operand.vmem [shape: f32[32,128], index: 1, kind: input, shape index: {}]
  %s2 = inlined_call_operand.vmem [shape: f32[1,128], index: 2, kind: input, shape index: {}]
  %s3 = inlined_call_operand.hbm [shape: f32[1024,128], index: 3, kind: output, shape index: {}]
  %s4 = sld [smem:[#allocation0]]
  $region22: #{tpu_custom_call.1} parent=0
    _
  %s6 = ssub.s32 1, %s4
  %s7 = scalar_select 0, %s6, %s4
  $region1: #{tpu_custom_call.1} parent=0
    #allocation2 [shape = 'u8[524288]{0}', space=vmem, size = 0x80000, scoped, tag = 'output window, operand 0, single buffered']
    #allocation3 [shape = 's32[1]{0}', space=sflag, size = 0x4, scoped, tag = 'scoped memory for tpu_custom_call.1']
    %8 = vsyncpa [#allocation3], 0
    // Predicated region
    $region2: #{tpu_custom_call.1} parent=1 // pred_check
      _
    $region3: #{tpu_custom_call.1} parent=1 // pred_check_branch
      %10 = sbr.rel (0) target = $region5
    $region4: #{tpu_custom_call.1} parent=1 // pred_region
      _
    $region5: #{tpu_custom_call.1} parent=1 // pred_fallthru
      _
    // Predicated region
    $region6: #{tpu_custom_call.1} parent=1 // pred_check
      _
    $region7: #{tpu_custom_call.1} parent=1 // pred_check_branch
      %12 = sbr.rel (0) target = $region9
    $region8: #{tpu_custom_call.1} parent=1 // pred_region
      _
    $region9: #{tpu_custom_call.1} parent=1 // pred_fallthru
      _
    // Predicated region
    $region10: #{tpu_custom_call.1} parent=1 // pred_check
      _
    $region11: #{tpu_custom_call.1} parent=1 // pred_check_branch
      %14 = sbr.rel (0) target = $region13
    $region12: #{tpu_custom_call.1} parent=1 // pred_region
      _
    $region13: #{tpu_custom_call.1} parent=1 // pred_fallthru
      _
    %v15 = vld [vmem:[%s0] sm:$0xff]
    %v16 = vld [vmem:[%s0 + $0x8] sm:$0xff]
    %v17 = vld [vmem:[%s0 + $0x10] sm:$0xff]
    %v18 = vld [vmem:[%s0 + $0x18] sm:$0xff]
    %v19 = vld [vmem:[%s0 + $0x20] sm:$0xff]
    %v20 = vld [vmem:[%s0 + $0x28] sm:$0xff]
    %v21 = vld [vmem:[%s0 + $0x30] sm:$0xff]
    %v22 = vld [vmem:[%s0 + $0x38] sm:$0xff]
    %v23 = vld [vmem:[%s0 + $0x40] sm:$0xff]
    %v24 = vld [vmem:[%s0 + $0x48] sm:$0xff]
    %v25 = vld [vmem:[%s0 + $0x50] sm:$0xff]
    %v26 = vld [vmem:[%s0 + $0x58] sm:$0xff]
    %v27 = vld [vmem:[%s0 + $0x60] sm:$0xff]
    %v28 = vld [vmem:[%s0 + $0x68] sm:$0xff]
    %v29 = vld [vmem:[%s0 + $0x70] sm:$0xff]
    %v30 = vld [vmem:[%s0 + $0x78] sm:$0xff]
    %v31 = vld [vmem:[%s0 + $0x80] sm:$0xff]
    %v32 = vld [vmem:[%s0 + $0x88] sm:$0xff]
    %v33 = vld [vmem:[%s0 + $0x90] sm:$0xff]
    %v34 = vld [vmem:[%s0 + $0x98] sm:$0xff]
    %v35 = vld [vmem:[%s0 + $0xa0] sm:$0xff]
    %v36 = vld [vmem:[%s0 + $0xa8] sm:$0xff]
    %v37 = vld [vmem:[%s0 + $0xb0] sm:$0xff]
    %v38 = vld [vmem:[%s0 + $0xb8] sm:$0xff]
    %v39 = vld [vmem:[%s0 + $0xc0] sm:$0xff]
    %v40 = vld [vmem:[%s0 + $0xc8] sm:$0xff]
    %v41 = vld [vmem:[%s0 + $0xd0] sm:$0xff]
    %v42 = vld [vmem:[%s0 + $0xd8] sm:$0xff]
    %v43 = vld [vmem:[%s0 + $0xe0] sm:$0xff]
    %v44 = vld [vmem:[%s0 + $0xe8] sm:$0xff]
    %v45 = vld [vmem:[%s0 + $0xf0] sm:$0xff]
    %v46 = vld [vmem:[%s0 + $0xf8] sm:$0xff]
    %v47 = vld [vmem:[%s0 + $0x100] sm:$0xff]
    %v48 = vld [vmem:[%s0 + $0x108] sm:$0xff]
    %v49 = vld [vmem:[%s0 + $0x110] sm:$0xff]
    %v50 = vld [vmem:[%s0 + $0x118] sm:$0xff]
    %v51 = vld [vmem:[%s0 + $0x120] sm:$0xff]
    %v52 = vld [vmem:[%s0 + $0x128] sm:$0xff]
    %v53 = vld [vmem:[%s0 + $0x130] sm:$0xff]
    %v54 = vld [vmem:[%s0 + $0x138] sm:$0xff]
    %v55 = vld [vmem:[%s0 + $0x140] sm:$0xff]
    %v56 = vld [vmem:[%s0 + $0x148] sm:$0xff]
    %v57 = vld [vmem:[%s0 + $0x150] sm:$0xff]
    %v58 = vld [vmem:[%s0 + $0x158] sm:$0xff]
    %v59 = vld [vmem:[%s0 + $0x160] sm:$0xff]
    %v60 = vld [vmem:[%s0 + $0x168] sm:$0xff]
    %v61 = vld [vmem:[%s0 + $0x170] sm:$0xff]
    %v62 = vld [vmem:[%s0 + $0x178] sm:$0xff]
    %v63 = vld [vmem:[%s0 + $0x180] sm:$0xff]
    %v64 = vld [vmem:[%s0 + $0x188] sm:$0xff]
    %v65 = vld [vmem:[%s0 + $0x190] sm:$0xff]
    %v66 = vld [vmem:[%s0 + $0x198] sm:$0xff]
    %v67 = vld [vmem:[%s0 + $0x1a0] sm:$0xff]
    %v68 = vld [vmem:[%s0 + $0x1a8] sm:$0xff]
    %v69 = vld [vmem:[%s0 + $0x1b0] sm:$0xff]
    %v70 = vld [vmem:[%s0 + $0x1b8] sm:$0xff]
    %v71 = vld [vmem:[%s0 + $0x1c0] sm:$0xff]
    %v72 = vld [vmem:[%s0 + $0x1c8] sm:$0xff]
    %v73 = vld [vmem:[%s0 + $0x1d0] sm:$0xff]
    %v74 = vld [vmem:[%s0 + $0x1d8] sm:$0xff]
    %v75 = vld [vmem:[%s0 + $0x1e0] sm:$0xff]
    %v76 = vld [vmem:[%s0 + $0x1e8] sm:$0xff]
    %v77 = vld [vmem:[%s0 + $0x1f0] sm:$0xff]
    %v78 = vld [vmem:[%s0 + $0x1f8] sm:$0xff]
    %v79 = vld [vmem:[%s0 + $0x200] sm:$0xff]
    %v80 = vld [vmem:[%s0 + $0x208] sm:$0xff]
    %v81 = vld [vmem:[%s0 + $0x210] sm:$0xff]
    %v82 = vld [vmem:[%s0 + $0x218] sm:$0xff]
    %v83 = vld [vmem:[%s0 + $0x220] sm:$0xff]
    %v84 = vld [vmem:[%s0 + $0x228] sm:$0xff]
    %v85 = vld [vmem:[%s0 + $0x230] sm:$0xff]
    %v86 = vld [vmem:[%s0 + $0x238] sm:$0xff]
    %v87 = vld [vmem:[%s0 + $0x240] sm:$0xff]
    %v88 = vld [vmem:[%s0 + $0x248] sm:$0xff]
    %v89 = vld [vmem:[%s0 + $0x250] sm:$0xff]
    %v90 = vld [vmem:[%s0 + $0x258] sm:$0xff]
    %v91 = vld [vmem:[%s0 + $0x260] sm:$0xff]
    %v92 = vld [vmem:[%s0 + $0x268] sm:$0xff]
    %v93 = vld [vmem:[%s0 + $0x270] sm:$0xff]
    %v94 = vld [vmem:[%s0 + $0x278] sm:$0xff]
    %v95 = vld [vmem:[%s0 + $0x280] sm:$0xff]
    %v96 = vld [vmem:[%s0 + $0x288] sm:$0xff]
    %v97 = vld [vmem:[%s0 + $0x290] sm:$0xff]
    %v98 = vld [vmem:[%s0 + $0x298] sm:$0xff]
    %v99 = vld [vmem:[%s0 + $0x2a0] sm:$0xff]
    %v100 = vld [vmem:[%s0 + $0x2a8] sm:$0xff]
    %v101 = vld [vmem:[%s0 + $0x2b0] sm:$0xff]
    %v102 = vld [vmem:[%s0 + $0x2b8] sm:$0xff]
    %v103 = vld [vmem:[%s0 + $0x2c0] sm:$0xff]
    %v104 = vld [vmem:[%s0 + $0x2c8] sm:$0xff]
    %v105 = vld [vmem:[%s0 + $0x2d0] sm:$0xff]
    %v106 = vld [vmem:[%s0 + $0x2d8] sm:$0xff]
    %v107 = vld [vmem:[%s0 + $0x2e0] sm:$0xff]
    %v108 = vld [vmem:[%s0 + $0x2e8] sm:$0xff]
    %v109 = vld [vmem:[%s0 + $0x2f0] sm:$0xff]
    %v110 = vld [vmem:[%s0 + $0x2f8] sm:$0xff]
    %v111 = vld [vmem:[%s0 + $0x300] sm:$0xff]
    %v112 = vld [vmem:[%s0 + $0x308] sm:$0xff]
    %v113 = vld [vmem:[%s0 + $0x310] sm:$0xff]
    %v114 = vld [vmem:[%s0 + $0x318] sm:$0xff]
    %v115 = vld [vmem:[%s0 + $0x320] sm:$0xff]
    %v116 = vld [vmem:[%s0 + $0x328] sm:$0xff]
    %v117 = vld [vmem:[%s0 + $0x330] sm:$0xff]
    %v118 = vld [vmem:[%s0 + $0x338] sm:$0xff]
    %v119 = vld [vmem:[%s0 + $0x340] sm:$0xff]
    %v120 = vld [vmem:[%s0 + $0x348] sm:$0xff]
    %v121 = vld [vmem:[%s0 + $0x350] sm:$0xff]
    %v122 = vld [vmem:[%s0 + $0x358] sm:$0xff]
    %v123 = vld [vmem:[%s0 + $0x360] sm:$0xff]
    %v124 = vld [vmem:[%s0 + $0x368] sm:$0xff]
    %v125 = vld [vmem:[%s0 + $0x370] sm:$0xff]
    %v126 = vld [vmem:[%s0 + $0x378] sm:$0xff]
    %v127 = vld [vmem:[%s0 + $0x380] sm:$0xff]
    %v128 = vld [vmem:[%s0 + $0x388] sm:$0xff]
    %v129 = vld [vmem:[%s0 + $0x390] sm:$0xff]
    %v130 = vld [vmem:[%s0 + $0x398] sm:$0xff]
    %v131 = vld [vmem:[%s0 + $0x3a0] sm:$0xff]
    %v132 = vld [vmem:[%s0 + $0x3a8] sm:$0xff]
    %v133 = vld [vmem:[%s0 + $0x3b0] sm:$0xff]
    %v134 = vld [vmem:[%s0 + $0x3b8] sm:$0xff]
    %v135 = vld [vmem:[%s0 + $0x3c0] sm:$0xff]
    %v136 = vld [vmem:[%s0 + $0x3c8] sm:$0xff]
    %v137 = vld [vmem:[%s0 + $0x3d0] sm:$0xff]
    %v138 = vld [vmem:[%s0 + $0x3d8] sm:$0xff]
    %v139 = vld [vmem:[%s0 + $0x3e0] sm:$0xff]
    %v140 = vld [vmem:[%s0 + $0x3e8] sm:$0xff]
    %v141 = vld [vmem:[%s0 + $0x3f0] sm:$0xff]
    %v142 = vld [vmem:[%s0 + $0x3f8] sm:$0xff]
    %v143 = vld [vmem:[%s1] sm:$0xff]
    %v144 = vld [vmem:[%s1 + $0x8] sm:$0xff]
    %v145 = vld [vmem:[%s1 + $0x10] sm:$0xff]
    %v146 = vld [vmem:[%s1 + $0x18] sm:$0xff]
    %v147 = vld [vmem:[%s2] sm:$0x1]
    %v149 = vlaneseq
    %v150 = vshrl.u32 %v149, 7
    %v151 = vsub.s32 0, %v150
    %v152 = vrot.slane %v147, %v151
    %vm154 = vcmask 261120
    %v156 = vsel %vm154, %v15, 0
    %v159 = vsel %vm154, %v16, 0
    %v162 = vsel %vm154, %v17, 0
    %v165 = vsel %vm154, %v18, 0
    %v168 = vsel %vm154, %v19, 0
    %v171 = vsel %vm154, %v20, 0
    %v174 = vsel %vm154, %v21, 0
    %v177 = vsel %vm154, %v22, 0
    %v180 = vsel %vm154, %v23, 0
    %v183 = vsel %vm154, %v24, 0
    %v186 = vsel %vm154, %v25, 0
    %v189 = vsel %vm154, %v26, 0
    %v192 = vsel %vm154, %v27, 0
    %v195 = vsel %vm154, %v28, 0
    %v198 = vsel %vm154, %v29, 0
    %v201 = vsel %vm154, %v30, 0
    %v204 = vsel %vm154, %v31, 0
    %v207 = vsel %vm154, %v32, 0
    %v210 = vsel %vm154, %v33, 0
    %v213 = vsel %vm154, %v34, 0
    %v216 = vsel %vm154, %v35, 0
    %v219 = vsel %vm154, %v36, 0
    %v222 = vsel %vm154, %v37, 0
    %v225 = vsel %vm154, %v38, 0
    %v228 = vsel %vm154, %v39, 0
    %v231 = vsel %vm154, %v40, 0
    %v234 = vsel %vm154, %v41, 0
    %v237 = vsel %vm154, %v42, 0
    %v240 = vsel %vm154, %v43, 0
    %v243 = vsel %vm154, %v44, 0
    %v246 = vsel %vm154, %v45, 0
    %v249 = vsel %vm154, %v46, 0
    %v252 = vsel %vm154, %v47, 0
    %v255 = vsel %vm154, %v48, 0
    %v258 = vsel %vm154, %v49, 0
    %v261 = vsel %vm154, %v50, 0
    %v264 = vsel %vm154, %v51, 0
    %v267 = vsel %vm154, %v52, 0
    %v270 = vsel %vm154, %v53, 0
    %v273 = vsel %vm154, %v54, 0
    %v276 = vsel %vm154, %v55, 0
    %v279 = vsel %vm154, %v56, 0
    %v282 = vsel %vm154, %v57, 0
    %v285 = vsel %vm154, %v58, 0
    %v288 = vsel %vm154, %v59, 0
    %v291 = vsel %vm154, %v60, 0
    %v294 = vsel %vm154, %v61, 0
    %v297 = vsel %vm154, %v62, 0
    %v300 = vsel %vm154, %v63, 0
    %v303 = vsel %vm154, %v64, 0
    %v306 = vsel %vm154, %v65, 0
    %v309 = vsel %vm154, %v66, 0
    %v312 = vsel %vm154, %v67, 0
    %v315 = vsel %vm154, %v68, 0
    %v318 = vsel %vm154, %v69, 0
    %v321 = vsel %vm154, %v70, 0
    %v324 = vsel %vm154, %v71, 0
    %v327 = vsel %vm154, %v72, 0
    %v330 = vsel %vm154, %v73, 0
    %v333 = vsel %vm154, %v74, 0
    %v336 = vsel %vm154, %v75, 0
    %v339 = vsel %vm154, %v76, 0
    %v342 = vsel %vm154, %v77, 0
    %v345 = vsel %vm154, %v78, 0
    %v348 = vsel %vm154, %v79, 0
    %v351 = vsel %vm154, %v80, 0
    %v354 = vsel %vm154, %v81, 0
    %v357 = vsel %vm154, %v82, 0
    %v360 = vsel %vm154, %v83, 0
    %v363 = vsel %vm154, %v84, 0
    %v366 = vsel %vm154, %v85, 0
    %v369 = vsel %vm154, %v86, 0
    %v372 = vsel %vm154, %v87, 0
    %v375 = vsel %vm154, %v88, 0
    %v378 = vsel %vm154, %v89, 0
    %v381 = vsel %vm154, %v90, 0
    %v384 = vsel %vm154, %v91, 0
    %v387 = vsel %vm154, %v92, 0
    %v390 = vsel %vm154, %v93, 0
    %v393 = vsel %vm154, %v94, 0
    %v396 = vsel %vm154, %v95, 0
    %v399 = vsel %vm154, %v96, 0
    %v402 = vsel %vm154, %v97, 0
    %v405 = vsel %vm154, %v98, 0
    %v408 = vsel %vm154, %v99, 0
    %v411 = vsel %vm154, %v100, 0
    %v414 = vsel %vm154, %v101, 0
    %v417 = vsel %vm154, %v102, 0
    %v420 = vsel %vm154, %v103, 0
    %v423 = vsel %vm154, %v104, 0
    %v426 = vsel %vm154, %v105, 0
    %v429 = vsel %vm154, %v106, 0
    %v432 = vsel %vm154, %v107, 0
    %v435 = vsel %vm154, %v108, 0
    %v438 = vsel %vm154, %v109, 0
    %v441 = vsel %vm154, %v110, 0
    %v444 = vsel %vm154, %v111, 0
    %v447 = vsel %vm154, %v112, 0
    %v450 = vsel %vm154, %v113, 0
    %v453 = vsel %vm154, %v114, 0
    %v456 = vsel %vm154, %v115, 0
    %v459 = vsel %vm154, %v116, 0
    %v462 = vsel %vm154, %v117, 0
    %v465 = vsel %vm154, %v118, 0
    %v468 = vsel %vm154, %v119, 0
    %v471 = vsel %vm154, %v120, 0
    %v474 = vsel %vm154, %v121, 0
    %v477 = vsel %vm154, %v122, 0
    %v480 = vsel %vm154, %v123, 0
    %v483 = vsel %vm154, %v124, 0
    %v486 = vsel %vm154, %v125, 0
    %v489 = vsel %vm154, %v126, 0
    %v492 = vsel %vm154, %v127, 0
    %v495 = vsel %vm154, %v128, 0
    %v498 = vsel %vm154, %v129, 0
    %v501 = vsel %vm154, %v130, 0
    %v504 = vsel %vm154, %v131, 0
    %v507 = vsel %vm154, %v132, 0
    %v510 = vsel %vm154, %v133, 0
    %v513 = vsel %vm154, %v134, 0
    %v516 = vsel %vm154, %v135, 0
    %v519 = vsel %vm154, %v136, 0
    %v522 = vsel %vm154, %v137, 0
    %v525 = vsel %vm154, %v138, 0
    %v528 = vsel %vm154, %v139, 0
    %v531 = vsel %vm154, %v140, 0
    %v534 = vsel %vm154, %v141, 0
    %v537 = vsel %vm154, %v142, 0
    %539 = vmatprep.subr.mxu0 0.0
    %540 = vmatpush1.msra.mxu0 0.0
    %541 = vmatprep.subr.mxu0 0.0
    %542 = vmatpush1.msra.mxu0 0.0
    %543 = vmatprep.subr.mxu0 0.0
    %544 = vmatpush1.msra.mxu0 0.0
    %545 = vmatprep.subr.mxu0 0.0
    %546 = vmatpush1.msra.mxu0 0.0
    %547 = vmatprep.subr.mxu0 0.0
    %548 = vmatpush1.msra.mxu0 0.0
    %549 = vmatprep.subr.mxu0 0.0
    %550 = vmatpush1.msra.mxu0 0.0
    %551 = vmatprep.subr.mxu0 0.0
    %552 = vmatpush1.msra.mxu0 0.0
    %553 = vmatprep.subr.mxu0 0.0
    %554 = vmatpush1.msra.mxu0 0.0
    %555 = vmatprep.subr.mxu0 0.0
    %556 = vmatpush1.msra.mxu0 0.0
    %557 = vmatprep.subr.mxu0 0.0
    %558 = vmatpush1.msra.mxu0 0.0
    %559 = vmatprep.subr.mxu0 0.0
    %560 = vmatpush1.msra.mxu0 0.0
    %561 = vmatprep.subr.mxu0 0.0
    %562 = vmatpush1.msra.mxu0 0.0
    %563 = vmatprep.subr.mxu0 0.0
    %564 = vmatpush1.msra.mxu0 %v146
    %565 = vmatprep.subr.mxu0 0.0
    %566 = vmatpush1.msra.mxu0 %v145
    %567 = vmatprep.subr.mxu0 0.0
    %568 = vmatpush1.msra.mxu0 %v144
    %569 = vmatprep.subr.mxu0 0.0
    %570 = vmatpush1.msra.mxu0 %v143
    %571 = vmatprep.subr.mxu0 0.0
    %572 = vmatpush2.msra.mxu0 0.0
    %573 = vmatprep.subr.mxu0 0.0
    %574 = vmatpush2.msra.mxu0 0.0
    %575 = vmatprep.subr.mxu0 0.0
    %576 = vmatpush2.msra.mxu0 0.0
    %577 = vmatprep.subr.mxu0 0.0
    %578 = vmatpush2.msra.mxu0 0.0
    %579 = vmatprep.subr.mxu0 0.0
    %580 = vmatpush2.msra.mxu0 0.0
    %581 = vmatprep.subr.mxu0 0.0
    %582 = vmatpush2.msra.mxu0 0.0
    %583 = vmatprep.subr.mxu0 0.0
    %584 = vmatpush2.msra.mxu0 0.0
    %585 = vmatprep.subr.mxu0 0.0
    %586 = vmatpush2.msra.mxu0 0.0
    %587 = vmatprep.subr.mxu0 0.0
    %588 = vmatpush2.msra.mxu0 0.0
    %589 = vmatprep.subr.mxu0 0.0
    %590 = vmatpush2.msra.mxu0 0.0
    %591 = vmatprep.subr.mxu0 0.0
    %592 = vmatpush2.msra.mxu0 0.0
    %593 = vmatprep.subr.mxu0 0.0
    %594 = vmatpush2.msra.mxu0 0.0
    %595 = vmatprep.subr.mxu0 0.0
    %596 = vmatpush2.msra.mxu0 0.0
    %597 = vmatprep.subr.mxu0 0.0
    %598 = vmatpush2.msra.mxu0 0.0
    %599 = vmatprep.subr.mxu0 0.0
    %600 = vmatpush2.msra.mxu0 0.0
    %601 = vmatprep.subr.mxu0 0.0
    %602 = vmatpush2.msra.mxu0 0.0
    %603 = vmatprep.mubr.f32.mxu0 0.0
    %604 = vmatmul.mubr.f32.gmra.mxu0 %v156
    %v605 = vpop.f32.mrf.mxu0
    %v606 = vadd.f32 %v152, %v605
    %v607 = vpop.f32.mrf.mxu0
    %608 = vmatprep.mubr.f32.mxu0 0.0
    %609 = vmatmul.mubr.f32.gmra.mxu0 %v159
    %v610 = vpop.f32.mrf.mxu0
    %v611 = vadd.f32 %v152, %v610
    %v612 = vpop.f32.mrf.mxu0
    %613 = vmatprep.mubr.f32.mxu0 0.0
    %614 = vmatmul.mubr.f32.gmra.mxu0 %v162
    %v615 = vpop.f32.mrf.mxu0
    %v616 = vadd.f32 %v152, %v615
    %v617 = vpop.f32.mrf.mxu0
    %618 = vmatprep.mubr.f32.mxu0 0.0
    %619 = vmatmul.mubr.f32.gmra.mxu0 %v165
    %v620 = vpop.f32.mrf.mxu0
    %v621 = vadd.f32 %v152, %v620
    %v622 = vpop.f32.mrf.mxu0
    %623 = vmatprep.mubr.f32.mxu0 0.0
    %624 = vmatmul.mubr.f32.gmra.mxu0 %v168
    %v625 = vpop.f32.mrf.mxu0
    %v626 = vadd.f32 %v152, %v625
    %v627 = vpop.f32.mrf.mxu0
    %628 = vmatprep.mubr.f32.mxu0 0.0
    %629 = vmatmul.mubr.f32.gmra.mxu0 %v171
    %v630 = vpop.f32.mrf.mxu0
    %v631 = vadd.f32 %v152, %v630
    %v632 = vpop.f32.mrf.mxu0
    %633 = vmatprep.mubr.f32.mxu0 0.0
    %634 = vmatmul.mubr.f32.gmra.mxu0 %v174
    %v635 = vpop.f32.mrf.mxu0
    %v636 = vadd.f32 %v152, %v635
    %v637 = vpop.f32.mrf.mxu0
    %638 = vmatprep.mubr.f32.mxu0 0.0
    %639 = vmatmul.mubr.f32.gmra.mxu0 %v177
    %v640 = vpop.f32.mrf.mxu0
    %v641 = vadd.f32 %v152, %v640
    %v642 = vpop.f32.mrf.mxu0
    %643 = vmatprep.mubr.f32.mxu0 0.0
    %644 = vmatmul.mubr.f32.gmra.mxu0 %v180
    %v645 = vpop.f32.mrf.mxu0
    %v646 = vadd.f32 %v152, %v645
    %v647 = vpop.f32.mrf.mxu0
    %648 = vmatprep.mubr.f32.mxu0 0.0
    %649 = vmatmul.mubr.f32.gmra.mxu0 %v183
    %v650 = vpop.f32.mrf.mxu0
    %v651 = vadd.f32 %v152, %v650
    %v652 = vpop.f32.mrf.mxu0
    %653 = vmatprep.mubr.f32.mxu0 0.0
    %654 = vmatmul.mubr.f32.gmra.mxu0 %v186
    %v655 = vpop.f32.mrf.mxu0
    %v656 = vadd.f32 %v152, %v655
    %v657 = vpop.f32.mrf.mxu0
    %658 = vmatprep.mubr.f32.mxu0 0.0
    %659 = vmatmul.mubr.f32.gmra.mxu0 %v189
    %v660 = vpop.f32.mrf.mxu0
    %v661 = vadd.f32 %v152, %v660
    %v662 = vpop.f32.mrf.mxu0
    %663 = vmatprep.mubr.f32.mxu0 0.0
    %664 = vmatmul.mubr.f32.gmra.mxu0 %v192
    %v665 = vpop.f32.mrf.mxu0
    %v666 = vadd.f32 %v152, %v665
    %v667 = vpop.f32.mrf.mxu0
    %668 = vmatprep.mubr.f32.mxu0 0.0
    %669 = vmatmul.mubr.f32.gmra.mxu0 %v195
    %v670 = vpop.f32.mrf.mxu0
    %v671 = vadd.f32 %v152, %v670
    %v672 = vpop.f32.mrf.mxu0
    %673 = vmatprep.mubr.f32.mxu0 0.0
    %674 = vmatmul.mubr.f32.gmra.mxu0 %v198
    %v675 = vpop.f32.mrf.mxu0
    %v676 = vadd.f32 %v152, %v675
    %v677 = vpop.f32.mrf.mxu0
    %678 = vmatprep.mubr.f32.mxu0 0.0
    %679 = vmatmul.mubr.f32.gmra.mxu0 %v201
    %v680 = vpop.f32.mrf.mxu0
    %v681 = vadd.f32 %v152, %v680
    %v682 = vpop.f32.mrf.mxu0
    %683 = vmatprep.mubr.f32.mxu0 0.0
    %684 = vmatmul.mubr.f32.gmra.mxu0 %v204
    %v685 = vpop.f32.mrf.mxu0
    %v686 = vadd.f32 %v152, %v685
    %v687 = vpop.f32.mrf.mxu0
    %688 = vmatprep.mubr.f32.mxu0 0.0
    %689 = vmatmul.mubr.f32.gmra.mxu0 %v207
    %v690 = vpop.f32.mrf.mxu0
    %v691 = vadd.f32 %v152, %v690
    %v692 = vpop.f32.mrf.mxu0
    %693 = vmatprep.mubr.f32.mxu0 0.0
    %694 = vmatmul.mubr.f32.gmra.mxu0 %v210
    %v695 = vpop.f32.mrf.mxu0
    %v696 = vadd.f32 %v152, %v695
    %v697 = vpop.f32.mrf.mxu0
    %698 = vmatprep.mubr.f32.mxu0 0.0
    %699 = vmatmul.mubr.f32.gmra.mxu0 %v213
    %v700 = vpop.f32.mrf.mxu0
    %v701 = vadd.f32 %v152, %v700
    %v702 = vpop.f32.mrf.mxu0
    %703 = vmatprep.mubr.f32.mxu0 0.0
    %704 = vmatmul.mubr.f32.gmra.mxu0 %v216
    %v705 = vpop.f32.mrf.mxu0
    %v706 = vadd.f32 %v152, %v705
    %v707 = vpop.f32.mrf.mxu0
    %708 = vmatprep.mubr.f32.mxu0 0.0
    %709 = vmatmul.mubr.f32.gmra.mxu0 %v219
    %v710 = vpop.f32.mrf.mxu0
    %v711 = vadd.f32 %v152, %v710
    %v712 = vpop.f32.mrf.mxu0
    %713 = vmatprep.mubr.f32.mxu0 0.0
    %714 = vmatmul.mubr.f32.gmra.mxu0 %v222
    %v715 = vpop.f32.mrf.mxu0
    %v716 = vadd.f32 %v152, %v715
    %v717 = vpop.f32.mrf.mxu0
    %718 = vmatprep.mubr.f32.mxu0 0.0
    %719 = vmatmul.mubr.f32.gmra.mxu0 %v225
    %v720 = vpop.f32.mrf.mxu0
    %v721 = vadd.f32 %v152, %v720
    %v722 = vpop.f32.mrf.mxu0
    %723 = vmatprep.mubr.f32.mxu0 0.0
    %724 = vmatmul.mubr.f32.gmra.mxu0 %v228
    %v725 = vpop.f32.mrf.mxu0
    %v726 = vadd.f32 %v152, %v725
    %v727 = vpop.f32.mrf.mxu0
    %728 = vmatprep.mubr.f32.mxu0 0.0
    %729 = vmatmul.mubr.f32.gmra.mxu0 %v231
    %v730 = vpop.f32.mrf.mxu0
    %v731 = vadd.f32 %v152, %v730
    %v732 = vpop.f32.mrf.mxu0
    %733 = vmatprep.mubr.f32.mxu0 0.0
    %734 = vmatmul.mubr.f32.gmra.mxu0 %v234
    %v735 = vpop.f32.mrf.mxu0
    %v736 = vadd.f32 %v152, %v735
    %v737 = vpop.f32.mrf.mxu0
    %738 = vmatprep.mubr.f32.mxu0 0.0
    %739 = vmatmul.mubr.f32.gmra.mxu0 %v237
    %v740 = vpop.f32.mrf.mxu0
    %v741 = vadd.f32 %v152, %v740
    %v742 = vpop.f32.mrf.mxu0
    %743 = vmatprep.mubr.f32.mxu0 0.0
    %744 = vmatmul.mubr.f32.gmra.mxu0 %v240
    %v745 = vpop.f32.mrf.mxu0
    %v746 = vadd.f32 %v152, %v745
    %v747 = vpop.f32.mrf.mxu0
    %748 = vmatprep.mubr.f32.mxu0 0.0
    %749 = vmatmul.mubr.f32.gmra.mxu0 %v243
    %v750 = vpop.f32.mrf.mxu0
    %v751 = vadd.f32 %v152, %v750
    %v752 = vpop.f32.mrf.mxu0
    %753 = vmatprep.mubr.f32.mxu0 0.0
    %754 = vmatmul.mubr.f32.gmra.mxu0 %v246
    %v755 = vpop.f32.mrf.mxu0
    %v756 = vadd.f32 %v152, %v755
    %v757 = vpop.f32.mrf.mxu0
    %758 = vmatprep.mubr.f32.mxu0 0.0
    %759 = vmatmul.mubr.f32.gmra.mxu0 %v249
    %v760 = vpop.f32.mrf.mxu0
    %v761 = vadd.f32 %v152, %v760
    %v762 = vpop.f32.mrf.mxu0
    %763 = vmatprep.mubr.f32.mxu0 0.0
    %764 = vmatmul.mubr.f32.gmra.mxu0 %v252
    %v765 = vpop.f32.mrf.mxu0
    %v766 = vadd.f32 %v152, %v765
    %v767 = vpop.f32.mrf.mxu0
    %768 = vmatprep.mubr.f32.mxu0 0.0
    %769 = vmatmul.mubr.f32.gmra.mxu0 %v255
    %v770 = vpop.f32.mrf.mxu0
    %v771 = vadd.f32 %v152, %v770
    %v772 = vpop.f32.mrf.mxu0
    %773 = vmatprep.mubr.f32.mxu0 0.0
    %774 = vmatmul.mubr.f32.gmra.mxu0 %v258
    %v775 = vpop.f32.mrf.mxu0
    %v776 = vadd.f32 %v152, %v775
    %v777 = vpop.f32.mrf.mxu0
    %778 = vmatprep.mubr.f32.mxu0 0.0
    %779 = vmatmul.mubr.f32.gmra.mxu0 %v261
    %v780 = vpop.f32.mrf.mxu0
    %v781 = vadd.f32 %v152, %v780
    %v782 = vpop.f32.mrf.mxu0
    %783 = vmatprep.mubr.f32.mxu0 0.0
    %784 = vmatmul.mubr.f32.gmra.mxu0 %v264
    %v785 = vpop.f32.mrf.mxu0
    %v786 = vadd.f32 %v152, %v785
    %v787 = vpop.f32.mrf.mxu0
    %788 = vmatprep.mubr.f32.mxu0 0.0
    %789 = vmatmul.mubr.f32.gmra.mxu0 %v267
    %v790 = vpop.f32.mrf.mxu0
    %v791 = vadd.f32 %v152, %v790
    %v792 = vpop.f32.mrf.mxu0
    %793 = vmatprep.mubr.f32.mxu0 0.0
    %794 = vmatmul.mubr.f32.gmra.mxu0 %v270
    %v795 = vpop.f32.mrf.mxu0
    %v796 = vadd.f32 %v152, %v795
    %v797 = vpop.f32.mrf.mxu0
    %798 = vmatprep.mubr.f32.mxu0 0.0
    %799 = vmatmul.mubr.f32.gmra.mxu0 %v273
    %v800 = vpop.f32.mrf.mxu0
    %v801 = vadd.f32 %v152, %v800
    %v802 = vpop.f32.mrf.mxu0
    %803 = vmatprep.mubr.f32.mxu0 0.0
    %804 = vmatmul.mubr.f32.gmra.mxu0 %v276
    %v805 = vpop.f32.mrf.mxu0
    %v806 = vadd.f32 %v152, %v805
    %v807 = vpop.f32.mrf.mxu0
    %808 = vmatprep.mubr.f32.mxu0 0.0
    %809 = vmatmul.mubr.f32.gmra.mxu0 %v279
    %v810 = vpop.f32.mrf.mxu0
    %v811 = vadd.f32 %v152, %v810
    %v812 = vpop.f32.mrf.mxu0
    %813 = vmatprep.mubr.f32.mxu0 0.0
    %814 = vmatmul.mubr.f32.gmra.mxu0 %v282
    %v815 = vpop.f32.mrf.mxu0
    %v816 = vadd.f32 %v152, %v815
    %v817 = vpop.f32.mrf.mxu0
    %818 = vmatprep.mubr.f32.mxu0 0.0
    %819 = vmatmul.mubr.f32.gmra.mxu0 %v285
    %v820 = vpop.f32.mrf.mxu0
    %v821 = vadd.f32 %v152, %v820
    %v822 = vpop.f32.mrf.mxu0
    %823 = vmatprep.mubr.f32.mxu0 0.0
    %824 = vmatmul.mubr.f32.gmra.mxu0 %v288
    %v825 = vpop.f32.mrf.mxu0
    %v826 = vadd.f32 %v152, %v825
    %v827 = vpop.f32.mrf.mxu0
    %828 = vmatprep.mubr.f32.mxu0 0.0
    %829 = vmatmul.mubr.f32.gmra.mxu0 %v291
    %v830 = vpop.f32.mrf.mxu0
    %v831 = vadd.f32 %v152, %v830
    %v832 = vpop.f32.mrf.mxu0
    %833 = vmatprep.mubr.f32.mxu0 0.0
    %834 = vmatmul.mubr.f32.gmra.mxu0 %v294
    %v835 = vpop.f32.mrf.mxu0
    %v836 = vadd.f32 %v152, %v835
    %v837 = vpop.f32.mrf.mxu0
    %838 = vmatprep.mubr.f32.mxu0 0.0
    %839 = vmatmul.mubr.f32.gmra.mxu0 %v297
    %v840 = vpop.f32.mrf.mxu0
    %v841 = vadd.f32 %v152, %v840
    %v842 = vpop.f32.mrf.mxu0
    %843 = vmatprep.mubr.f32.mxu0 0.0
    %844 = vmatmul.mubr.f32.gmra.mxu0 %v300
    %v845 = vpop.f32.mrf.mxu0
    %v846 = vadd.f32 %v152, %v845
    %v847 = vpop.f32.mrf.mxu0
    %848 = vmatprep.mubr.f32.mxu0 0.0
    %849 = vmatmul.mubr.f32.gmra.mxu0 %v303
    %v850 = vpop.f32.mrf.mxu0
    %v851 = vadd.f32 %v152, %v850
    %v852 = vpop.f32.mrf.mxu0
    %853 = vmatprep.mubr.f32.mxu0 0.0
    %854 = vmatmul.mubr.f32.gmra.mxu0 %v306
    %v855 = vpop.f32.mrf.mxu0
    %v856 = vadd.f32 %v152, %v855
    %v857 = vpop.f32.mrf.mxu0
    %858 = vmatprep.mubr.f32.mxu0 0.0
    %859 = vmatmul.mubr.f32.gmra.mxu0 %v309
    %v860 = vpop.f32.mrf.mxu0
    %v861 = vadd.f32 %v152, %v860
    %v862 = vpop.f32.mrf.mxu0
    %863 = vmatprep.mubr.f32.mxu0 0.0
    %864 = vmatmul.mubr.f32.gmra.mxu0 %v312
    %v865 = vpop.f32.mrf.mxu0
    %v866 = vadd.f32 %v152, %v865
    %v867 = vpop.f32.mrf.mxu0
    %868 = vmatprep.mubr.f32.mxu0 0.0
    %869 = vmatmul.mubr.f32.gmra.mxu0 %v315
    %v870 = vpop.f32.mrf.mxu0
    %v871 = vadd.f32 %v152, %v870
    %v872 = vpop.f32.mrf.mxu0
    %873 = vmatprep.mubr.f32.mxu0 0.0
    %874 = vmatmul.mubr.f32.gmra.mxu0 %v318
    %v875 = vpop.f32.mrf.mxu0
    %v876 = vadd.f32 %v152, %v875
    %v877 = vpop.f32.mrf.mxu0
    %878 = vmatprep.mubr.f32.mxu0 0.0
    %879 = vmatmul.mubr.f32.gmra.mxu0 %v321
    %v880 = vpop.f32.mrf.mxu0
    %v881 = vadd.f32 %v152, %v880
    %v882 = vpop.f32.mrf.mxu0
    %883 = vmatprep.mubr.f32.mxu0 0.0
    %884 = vmatmul.mubr.f32.gmra.mxu0 %v324
    %v885 = vpop.f32.mrf.mxu0
    %v886 = vadd.f32 %v152, %v885
    %v887 = vpop.f32.mrf.mxu0
    %888 = vmatprep.mubr.f32.mxu0 0.0
    %889 = vmatmul.mubr.f32.gmra.mxu0 %v327
    %v890 = vpop.f32.mrf.mxu0
    %v891 = vadd.f32 %v152, %v890
    %v892 = vpop.f32.mrf.mxu0
    %893 = vmatprep.mubr.f32.mxu0 0.0
    %894 = vmatmul.mubr.f32.gmra.mxu0 %v330
    %v895 = vpop.f32.mrf.mxu0
    %v896 = vadd.f32 %v152, %v895
    %v897 = vpop.f32.mrf.mxu0
    %898 = vmatprep.mubr.f32.mxu0 0.0
    %899 = vmatmul.mubr.f32.gmra.mxu0 %v333
    %v900 = vpop.f32.mrf.mxu0
    %v901 = vadd.f32 %v152, %v900
    %v902 = vpop.f32.mrf.mxu0
    %903 = vmatprep.mubr.f32.mxu0 0.0
    %904 = vmatmul.mubr.f32.gmra.mxu0 %v336
    %v905 = vpop.f32.mrf.mxu0
    %v906 = vadd.f32 %v152, %v905
    %v907 = vpop.f32.mrf.mxu0
    %908 = vmatprep.mubr.f32.mxu0 0.0
    %909 = vmatmul.mubr.f32.gmra.mxu0 %v339
    %v910 = vpop.f32.mrf.mxu0
    %v911 = vadd.f32 %v152, %v910
    %v912 = vpop.f32.mrf.mxu0
    %913 = vmatprep.mubr.f32.mxu0 0.0
    %914 = vmatmul.mubr.f32.gmra.mxu0 %v342
    %v915 = vpop.f32.mrf.mxu0
    %v916 = vadd.f32 %v152, %v915
    %v917 = vpop.f32.mrf.mxu0
    %918 = vmatprep.mubr.f32.mxu0 0.0
    %919 = vmatmul.mubr.f32.gmra.mxu0 %v345
    %v920 = vpop.f32.mrf.mxu0
    %v921 = vadd.f32 %v152, %v920
    %v922 = vpop.f32.mrf.mxu0
    %923 = vmatprep.mubr.f32.mxu0 0.0
    %924 = vmatmul.mubr.f32.gmra.mxu0 %v348
    %v925 = vpop.f32.mrf.mxu0
    %v926 = vadd.f32 %v152, %v925
    %v927 = vpop.f32.mrf.mxu0
    %928 = vmatprep.mubr.f32.mxu0 0.0
    %929 = vmatmul.mubr.f32.gmra.mxu0 %v351
    %v930 = vpop.f32.mrf.mxu0
    %v931 = vadd.f32 %v152, %v930
    %v932 = vpop.f32.mrf.mxu0
    %933 = vmatprep.mubr.f32.mxu0 0.0
    %934 = vmatmul.mubr.f32.gmra.mxu0 %v354
    %v935 = vpop.f32.mrf.mxu0
    %v936 = vadd.f32 %v152, %v935
    %v937 = vpop.f32.mrf.mxu0
    %938 = vmatprep.mubr.f32.mxu0 0.0
    %939 = vmatmul.mubr.f32.gmra.mxu0 %v357
    %v940 = vpop.f32.mrf.mxu0
    %v941 = vadd.f32 %v152, %v940
    %v942 = vpop.f32.mrf.mxu0
    %943 = vmatprep.mubr.f32.mxu0 0.0
    %944 = vmatmul.mubr.f32.gmra.mxu0 %v360
    %v945 = vpop.f32.mrf.mxu0
    %v946 = vadd.f32 %v152, %v945
    %v947 = vpop.f32.mrf.mxu0
    %948 = vmatprep.mubr.f32.mxu0 0.0
    %949 = vmatmul.mubr.f32.gmra.mxu0 %v363
    %v950 = vpop.f32.mrf.mxu0
    %v951 = vadd.f32 %v152, %v950
    %v952 = vpop.f32.mrf.mxu0
    %953 = vmatprep.mubr.f32.mxu0 0.0
    %954 = vmatmul.mubr.f32.gmra.mxu0 %v366
    %v955 = vpop.f32.mrf.mxu0
    %v956 = vadd.f32 %v152, %v955
    %v957 = vpop.f32.mrf.mxu0
    %958 = vmatprep.mubr.f32.mxu0 0.0
    %959 = vmatmul.mubr.f32.gmra.mxu0 %v369
    %v960 = vpop.f32.mrf.mxu0
    %v961 = vadd.f32 %v152, %v960
    %v962 = vpop.f32.mrf.mxu0
    %963 = vmatprep.mubr.f32.mxu0 0.0
    %964 = vmatmul.mubr.f32.gmra.mxu0 %v372
    %v965 = vpop.f32.mrf.mxu0
    %v966 = vadd.f32 %v152, %v965
    %v967 = vpop.f32.mrf.mxu0
    %968 = vmatprep.mubr.f32.mxu0 0.0
    %969 = vmatmul.mubr.f32.gmra.mxu0 %v375
    %v970 = vpop.f32.mrf.mxu0
    %v971 = vadd.f32 %v152, %v970
    %v972 = vpop.f32.mrf.mxu0
    %973 = vmatprep.mubr.f32.mxu0 0.0
    %974 = vmatmul.mubr.f32.gmra.mxu0 %v378
    %v975 = vpop.f32.mrf.mxu0
    %v976 = vadd.f32 %v152, %v975
    %v977 = vpop.f32.mrf.mxu0
    %978 = vmatprep.mubr.f32.mxu0 0.0
    %979 = vmatmul.mubr.f32.gmra.mxu0 %v381
    %v980 = vpop.f32.mrf.mxu0
    %v981 = vadd.f32 %v152, %v980
    %v982 = vpop.f32.mrf.mxu0
    %983 = vmatprep.mubr.f32.mxu0 0.0
    %984 = vmatmul.mubr.f32.gmra.mxu0 %v384
    %v985 = vpop.f32.mrf.mxu0
    %v986 = vadd.f32 %v152, %v985
    %v987 = vpop.f32.mrf.mxu0
    %988 = vmatprep.mubr.f32.mxu0 0.0
    %989 = vmatmul.mubr.f32.gmra.mxu0 %v387
    %v990 = vpop.f32.mrf.mxu0
    %v991 = vadd.f32 %v152, %v990
    %v992 = vpop.f32.mrf.mxu0
    %993 = vmatprep.mubr.f32.mxu0 0.0
    %994 = vmatmul.mubr.f32.gmra.mxu0 %v390
    %v995 = vpop.f32.mrf.mxu0
    %v996 = vadd.f32 %v152, %v995
    %v997 = vpop.f32.mrf.mxu0
    %998 = vmatprep.mubr.f32.mxu0 0.0
    %999 = vmatmul.mubr.f32.gmra.mxu0 %v393
    %v1000 = vpop.f32.mrf.mxu0
    %v1001 = vadd.f32 %v152, %v1000
    %v1002 = vpop.f32.mrf.mxu0
    %1003 = vmatprep.mubr.f32.mxu0 0.0
    %1004 = vmatmul.mubr.f32.gmra.mxu0 %v396
    %v1005 = vpop.f32.mrf.mxu0
    %v1006 = vadd.f32 %v152, %v1005
    %v1007 = vpop.f32.mrf.mxu0
    %1008 = vmatprep.mubr.f32.mxu0 0.0
    %1009 = vmatmul.mubr.f32.gmra.mxu0 %v399
    %v1010 = vpop.f32.mrf.mxu0
    %v1011 = vadd.f32 %v152, %v1010
    %v1012 = vpop.f32.mrf.mxu0
    %1013 = vmatprep.mubr.f32.mxu0 0.0
    %1014 = vmatmul.mubr.f32.gmra.mxu0 %v402
    %v1015 = vpop.f32.mrf.mxu0
    %v1016 = vadd.f32 %v152, %v1015
    %v1017 = vpop.f32.mrf.mxu0
    %1018 = vmatprep.mubr.f32.mxu0 0.0
    %1019 = vmatmul.mubr.f32.gmra.mxu0 %v405
    %v1020 = vpop.f32.mrf.mxu0
    %v1021 = vadd.f32 %v152, %v1020
    %v1022 = vpop.f32.mrf.mxu0
    %1023 = vmatprep.mubr.f32.mxu0 0.0
    %1024 = vmatmul.mubr.f32.gmra.mxu0 %v408
    %v1025 = vpop.f32.mrf.mxu0
    %v1026 = vadd.f32 %v152, %v1025
    %v1027 = vpop.f32.mrf.mxu0
    %1028 = vmatprep.mubr.f32.mxu0 0.0
    %1029 = vmatmul.mubr.f32.gmra.mxu0 %v411
    %v1030 = vpop.f32.mrf.mxu0
    %v1031 = vadd.f32 %v152, %v1030
    %v1032 = vpop.f32.mrf.mxu0
    %1033 = vmatprep.mubr.f32.mxu0 0.0
    %1034 = vmatmul.mubr.f32.gmra.mxu0 %v414
    %v1035 = vpop.f32.mrf.mxu0
    %v1036 = vadd.f32 %v152, %v1035
    %v1037 = vpop.f32.mrf.mxu0
    %1038 = vmatprep.mubr.f32.mxu0 0.0
    %1039 = vmatmul.mubr.f32.gmra.mxu0 %v417
    %v1040 = vpop.f32.mrf.mxu0
    %v1041 = vadd.f32 %v152, %v1040
    %v1042 = vpop.f32.mrf.mxu0
    %1043 = vmatprep.mubr.f32.mxu0 0.0
    %1044 = vmatmul.mubr.f32.gmra.mxu0 %v420
    %v1045 = vpop.f32.mrf.mxu0
    %v1046 = vadd.f32 %v152, %v1045
    %v1047 = vpop.f32.mrf.mxu0
    %1048 = vmatprep.mubr.f32.mxu0 0.0
    %1049 = vmatmul.mubr.f32.gmra.mxu0 %v423
    %v1050 = vpop.f32.mrf.mxu0
    %v1051 = vadd.f32 %v152, %v1050
    %v1052 = vpop.f32.mrf.mxu0
    %1053 = vmatprep.mubr.f32.mxu0 0.0
    %1054 = vmatmul.mubr.f32.gmra.mxu0 %v426
    %v1055 = vpop.f32.mrf.mxu0
    %v1056 = vadd.f32 %v152, %v1055
    %v1057 = vpop.f32.mrf.mxu0
    %1058 = vmatprep.mubr.f32.mxu0 0.0
    %1059 = vmatmul.mubr.f32.gmra.mxu0 %v429
    %v1060 = vpop.f32.mrf.mxu0
    %v1061 = vadd.f32 %v152, %v1060
    %v1062 = vpop.f32.mrf.mxu0
    %1063 = vmatprep.mubr.f32.mxu0 0.0
    %1064 = vmatmul.mubr.f32.gmra.mxu0 %v432
    %v1065 = vpop.f32.mrf.mxu0
    %v1066 = vadd.f32 %v152, %v1065
    %v1067 = vpop.f32.mrf.mxu0
    %1068 = vmatprep.mubr.f32.mxu0 0.0
    %1069 = vmatmul.mubr.f32.gmra.mxu0 %v435
    %v1070 = vpop.f32.mrf.mxu0
    %v1071 = vadd.f32 %v152, %v1070
    %v1072 = vpop.f32.mrf.mxu0
    %1073 = vmatprep.mubr.f32.mxu0 0.0
    %1074 = vmatmul.mubr.f32.gmra.mxu0 %v438
    %v1075 = vpop.f32.mrf.mxu0
    %v1076 = vadd.f32 %v152, %v1075
    %v1077 = vpop.f32.mrf.mxu0
    %1078 = vmatprep.mubr.f32.mxu0 0.0
    %1079 = vmatmul.mubr.f32.gmra.mxu0 %v441
    %v1080 = vpop.f32.mrf.mxu0
    %v1081 = vadd.f32 %v152, %v1080
    %v1082 = vpop.f32.mrf.mxu0
    %1083 = vmatprep.mubr.f32.mxu0 0.0
    %1084 = vmatmul.mubr.f32.gmra.mxu0 %v444
    %v1085 = vpop.f32.mrf.mxu0
    %v1086 = vadd.f32 %v152, %v1085
    %v1087 = vpop.f32.mrf.mxu0
    %1088 = vmatprep.mubr.f32.mxu0 0.0
    %1089 = vmatmul.mubr.f32.gmra.mxu0 %v447
    %v1090 = vpop.f32.mrf.mxu0
    %v1091 = vadd.f32 %v152, %v1090
    %v1092 = vpop.f32.mrf.mxu0
    %1093 = vmatprep.mubr.f32.mxu0 0.0
    %1094 = vmatmul.mubr.f32.gmra.mxu0 %v450
    %v1095 = vpop.f32.mrf.mxu0
    %v1096 = vadd.f32 %v152, %v1095
    %v1097 = vpop.f32.mrf.mxu0
    %1098 = vmatprep.mubr.f32.mxu0 0.0
    %1099 = vmatmul.mubr.f32.gmra.mxu0 %v453
    %v1100 = vpop.f32.mrf.mxu0
    %v1101 = vadd.f32 %v152, %v1100
    %v1102 = vpop.f32.mrf.mxu0
    %1103 = vmatprep.mubr.f32.mxu0 0.0
    %1104 = vmatmul.mubr.f32.gmra.mxu0 %v456
    %v1105 = vpop.f32.mrf.mxu0
    %v1106 = vadd.f32 %v152, %v1105
    %v1107 = vpop.f32.mrf.mxu0
    %1108 = vmatprep.mubr.f32.mxu0 0.0
    %1109 = vmatmul.mubr.f32.gmra.mxu0 %v459
    %v1110 = vpop.f32.mrf.mxu0
    %v1111 = vadd.f32 %v152, %v1110
    %v1112 = vpop.f32.mrf.mxu0
    %1113 = vmatprep.mubr.f32.mxu0 0.0
    %1114 = vmatmul.mubr.f32.gmra.mxu0 %v462
    %v1115 = vpop.f32.mrf.mxu0
    %v1116 = vadd.f32 %v152, %v1115
    %v1117 = vpop.f32.mrf.mxu0
    %1118 = vmatprep.mubr.f32.mxu0 0.0
    %1119 = vmatmul.mubr.f32.gmra.mxu0 %v465
    %v1120 = vpop.f32.mrf.mxu0
    %v1121 = vadd.f32 %v152, %v1120
    %v1122 = vpop.f32.mrf.mxu0
    %1123 = vmatprep.mubr.f32.mxu0 0.0
    %1124 = vmatmul.mubr.f32.gmra.mxu0 %v468
    %v1125 = vpop.f32.mrf.mxu0
    %v1126 = vadd.f32 %v152, %v1125
    %v1127 = vpop.f32.mrf.mxu0
    %1128 = vmatprep.mubr.f32.mxu0 0.0
    %1129 = vmatmul.mubr.f32.gmra.mxu0 %v471
    %v1130 = vpop.f32.mrf.mxu0
    %v1131 = vadd.f32 %v152, %v1130
    %v1132 = vpop.f32.mrf.mxu0
    %1133 = vmatprep.mubr.f32.mxu0 0.0
    %1134 = vmatmul.mubr.f32.gmra.mxu0 %v474
    %v1135 = vpop.f32.mrf.mxu0
    %v1136 = vadd.f32 %v152, %v1135
    %v1137 = vpop.f32.mrf.mxu0
    %1138 = vmatprep.mubr.f32.mxu0 0.0
    %1139 = vmatmul.mubr.f32.gmra.mxu0 %v477
    %v1140 = vpop.f32.mrf.mxu0
    %v1141 = vadd.f32 %v152, %v1140
    %v1142 = vpop.f32.mrf.mxu0
    %1143 = vmatprep.mubr.f32.mxu0 0.0
    %1144 = vmatmul.mubr.f32.gmra.mxu0 %v480
    %v1145 = vpop.f32.mrf.mxu0
    %v1146 = vadd.f32 %v152, %v1145
    %v1147 = vpop.f32.mrf.mxu0
    %1148 = vmatprep.mubr.f32.mxu0 0.0
    %1149 = vmatmul.mubr.f32.gmra.mxu0 %v483
    %v1150 = vpop.f32.mrf.mxu0
    %v1151 = vadd.f32 %v152, %v1150
    %v1152 = vpop.f32.mrf.mxu0
    %1153 = vmatprep.mubr.f32.mxu0 0.0
    %1154 = vmatmul.mubr.f32.gmra.mxu0 %v486
    %v1155 = vpop.f32.mrf.mxu0
    %v1156 = vadd.f32 %v152, %v1155
    %v1157 = vpop.f32.mrf.mxu0
    %1158 = vmatprep.mubr.f32.mxu0 0.0
    %1159 = vmatmul.mubr.f32.gmra.mxu0 %v489
    %v1160 = vpop.f32.mrf.mxu0
    %v1161 = vadd.f32 %v152, %v1160
    %v1162 = vpop.f32.mrf.mxu0
    %1163 = vmatprep.mubr.f32.mxu0 0.0
    %1164 = vmatmul.mubr.f32.gmra.mxu0 %v492
    %v1165 = vpop.f32.mrf.mxu0
    %v1166 = vadd.f32 %v152, %v1165
    %v1167 = vpop.f32.mrf.mxu0
    %1168 = vmatprep.mubr.f32.mxu0 0.0
    %1169 = vmatmul.mubr.f32.gmra.mxu0 %v495
    %v1170 = vpop.f32.mrf.mxu0
    %v1171 = vadd.f32 %v152, %v1170
    %v1172 = vpop.f32.mrf.mxu0
    %1173 = vmatprep.mubr.f32.mxu0 0.0
    %1174 = vmatmul.mubr.f32.gmra.mxu0 %v498
    %v1175 = vpop.f32.mrf.mxu0
    %v1176 = vadd.f32 %v152, %v1175
    %v1177 = vpop.f32.mrf.mxu0
    %1178 = vmatprep.mubr.f32.mxu0 0.0
    %1179 = vmatmul.mubr.f32.gmra.mxu0 %v501
    %v1180 = vpop.f32.mrf.mxu0
    %v1181 = vadd.f32 %v152, %v1180
    %v1182 = vpop.f32.mrf.mxu0
    %1183 = vmatprep.mubr.f32.mxu0 0.0
    %1184 = vmatmul.mubr.f32.gmra.mxu0 %v504
    %v1185 = vpop.f32.mrf.mxu0
    %v1186 = vadd.f32 %v152, %v1185
    %v1187 = vpop.f32.mrf.mxu0
    %1188 = vmatprep.mubr.f32.mxu0 0.0
    %1189 = vmatmul.mubr.f32.gmra.mxu0 %v507
    %v1190 = vpop.f32.mrf.mxu0
    %v1191 = vadd.f32 %v152, %v1190
    %v1192 = vpop.f32.mrf.mxu0
    %1193 = vmatprep.mubr.f32.mxu0 0.0
    %1194 = vmatmul.mubr.f32.gmra.mxu0 %v510
    %v1195 = vpop.f32.mrf.mxu0
    %v1196 = vadd.f32 %v152, %v1195
    %v1197 = vpop.f32.mrf.mxu0
    %1198 = vmatprep.mubr.f32.mxu0 0.0
    %1199 = vmatmul.mubr.f32.gmra.mxu0 %v513
    %v1200 = vpop.f32.mrf.mxu0
    %v1201 = vadd.f32 %v152, %v1200
    %v1202 = vpop.f32.mrf.mxu0
    %1203 = vmatprep.mubr.f32.mxu0 0.0
    %1204 = vmatmul.mubr.f32.gmra.mxu0 %v516
    %v1205 = vpop.f32.mrf.mxu0
    %v1206 = vadd.f32 %v152, %v1205
    %v1207 = vpop.f32.mrf.mxu0
    %1208 = vmatprep.mubr.f32.mxu0 0.0
    %1209 = vmatmul.mubr.f32.gmra.mxu0 %v519
    %v1210 = vpop.f32.mrf.mxu0
    %v1211 = vadd.f32 %v152, %v1210
    %v1212 = vpop.f32.mrf.mxu0
    %1213 = vmatprep.mubr.f32.mxu0 0.0
    %1214 = vmatmul.mubr.f32.gmra.mxu0 %v522
    %v1215 = vpop.f32.mrf.mxu0
    %v1216 = vadd.f32 %v152, %v1215
    %v1217 = vpop.f32.mrf.mxu0
    %1218 = vmatprep.mubr.f32.mxu0 0.0
    %1219 = vmatmul.mubr.f32.gmra.mxu0 %v525
    %v1220 = vpop.f32.mrf.mxu0
    %v1221 = vadd.f32 %v152, %v1220
    %v1222 = vpop.f32.mrf.mxu0
    %1223 = vmatprep.mubr.f32.mxu0 0.0
    %1224 = vmatmul.mubr.f32.gmra.mxu0 %v528
    %v1225 = vpop.f32.mrf.mxu0
    %v1226 = vadd.f32 %v152, %v1225
    %v1227 = vpop.f32.mrf.mxu0
    %1228 = vmatprep.mubr.f32.mxu0 0.0
    %1229 = vmatmul.mubr.f32.gmra.mxu0 %v531
    %v1230 = vpop.f32.mrf.mxu0
    %v1231 = vadd.f32 %v152, %v1230
    %v1232 = vpop.f32.mrf.mxu0
    %1233 = vmatprep.mubr.f32.mxu0 0.0
    %1234 = vmatmul.mubr.f32.gmra.mxu0 %v534
    %v1235 = vpop.f32.mrf.mxu0
    %v1236 = vadd.f32 %v152, %v1235
    %v1237 = vpop.f32.mrf.mxu0
    %1238 = vmatprep.mubr.f32.mxu0 0.0
    %1239 = vmatmul.mubr.f32.gmra.mxu0 %v537
    %v1240 = vpop.f32.mrf.mxu0
    %v1241 = vadd.f32 %v152, %v1240
    %v1242 = vpop.f32.mrf.mxu0
    %1243 = vdwg.mxu0
    %1244 = vmax.xlane.f32.xlu0 %v606
    %v1245 = vpop.xlane.xlu0 %1244
    %1246 = vmax.xlane.f32.xlu0 %v611
    %v1247 = vpop.xlane.xlu0 %1246
    %1248 = vmax.xlane.f32.xlu0 %v616
    %v1249 = vpop.xlane.xlu0 %1248
    %1250 = vmax.xlane.f32.xlu0 %v621
    %v1251 = vpop.xlane.xlu0 %1250
    %1252 = vmax.xlane.f32.xlu0 %v626
    %v1253 = vpop.xlane.xlu0 %1252
    %1254 = vmax.xlane.f32.xlu0 %v631
    %v1255 = vpop.xlane.xlu0 %1254
    %1256 = vmax.xlane.f32.xlu0 %v636
    %v1257 = vpop.xlane.xlu0 %1256
    %1258 = vmax.xlane.f32.xlu0 %v641
    %v1259 = vpop.xlane.xlu0 %1258
    %1260 = vmax.xlane.f32.xlu0 %v646
    %v1261 = vpop.xlane.xlu0 %1260
    %1262 = vmax.xlane.f32.xlu0 %v651
    %v1263 = vpop.xlane.xlu0 %1262
    %1264 = vmax.xlane.f32.xlu0 %v656
    %v1265 = vpop.xlane.xlu0 %1264
    %1266 = vmax.xlane.f32.xlu0 %v661
    %v1267 = vpop.xlane.xlu0 %1266
    %1268 = vmax.xlane.f32.xlu0 %v666
    %v1269 = vpop.xlane.xlu0 %1268
    %1270 = vmax.xlane.f32.xlu0 %v671
    %v1271 = vpop.xlane.xlu0 %1270
    %1272 = vmax.xlane.f32.xlu0 %v676
    %v1273 = vpop.xlane.xlu0 %1272
    %1274 = vmax.xlane.f32.xlu0 %v681
    %v1275 = vpop.xlane.xlu0 %1274
    %1276 = vmax.xlane.f32.xlu0 %v686
    %v1277 = vpop.xlane.xlu0 %1276
    %1278 = vmax.xlane.f32.xlu0 %v691
    %v1279 = vpop.xlane.xlu0 %1278
    %1280 = vmax.xlane.f32.xlu0 %v696
    %v1281 = vpop.xlane.xlu0 %1280
    %1282 = vmax.xlane.f32.xlu0 %v701
    %v1283 = vpop.xlane.xlu0 %1282
    %1284 = vmax.xlane.f32.xlu0 %v706
    %v1285 = vpop.xlane.xlu0 %1284
    %1286 = vmax.xlane.f32.xlu0 %v711
    %v1287 = vpop.xlane.xlu0 %1286
    %1288 = vmax.xlane.f32.xlu0 %v716
    %v1289 = vpop.xlane.xlu0 %1288
    %1290 = vmax.xlane.f32.xlu0 %v721
    %v1291 = vpop.xlane.xlu0 %1290
    %1292 = vmax.xlane.f32.xlu0 %v726
    %v1293 = vpop.xlane.xlu0 %1292
    %1294 = vmax.xlane.f32.xlu0 %v731
    %v1295 = vpop.xlane.xlu0 %1294
    %1296 = vmax.xlane.f32.xlu0 %v736
    %v1297 = vpop.xlane.xlu0 %1296
    %1298 = vmax.xlane.f32.xlu0 %v741
    %v1299 = vpop.xlane.xlu0 %1298
    %1300 = vmax.xlane.f32.xlu0 %v746
    %v1301 = vpop.xlane.xlu0 %1300
    %1302 = vmax.xlane.f32.xlu0 %v751
    %v1303 = vpop.xlane.xlu0 %1302
    %1304 = vmax.xlane.f32.xlu0 %v756
    %v1305 = vpop.xlane.xlu0 %1304
    %1306 = vmax.xlane.f32.xlu0 %v761
    %v1307 = vpop.xlane.xlu0 %1306
    %1308 = vmax.xlane.f32.xlu0 %v766
    %v1309 = vpop.xlane.xlu0 %1308
    %1310 = vmax.xlane.f32.xlu0 %v771
    %v1311 = vpop.xlane.xlu0 %1310
    %1312 = vmax.xlane.f32.xlu0 %v776
    %v1313 = vpop.xlane.xlu0 %1312
    %1314 = vmax.xlane.f32.xlu0 %v781
    %v1315 = vpop.xlane.xlu0 %1314
    %1316 = vmax.xlane.f32.xlu0 %v786
    %v1317 = vpop.xlane.xlu0 %1316
    %1318 = vmax.xlane.f32.xlu0 %v791
    %v1319 = vpop.xlane.xlu0 %1318
    %1320 = vmax.xlane.f32.xlu0 %v796
    %v1321 = vpop.xlane.xlu0 %1320
    %1322 = vmax.xlane.f32.xlu0 %v801
    %v1323 = vpop.xlane.xlu0 %1322
    %1324 = vmax.xlane.f32.xlu0 %v806
    %v1325 = vpop.xlane.xlu0 %1324
    %1326 = vmax.xlane.f32.xlu0 %v811
    %v1327 = vpop.xlane.xlu0 %1326
    %1328 = vmax.xlane.f32.xlu0 %v816
    %v1329 = vpop.xlane.xlu0 %1328
    %1330 = vmax.xlane.f32.xlu0 %v821
    %v1331 = vpop.xlane.xlu0 %1330
    %1332 = vmax.xlane.f32.xlu0 %v826
    %v1333 = vpop.xlane.xlu0 %1332
    %1334 = vmax.xlane.f32.xlu0 %v831
    %v1335 = vpop.xlane.xlu0 %1334
    %1336 = vmax.xlane.f32.xlu0 %v836
    %v1337 = vpop.xlane.xlu0 %1336
    %1338 = vmax.xlane.f32.xlu0 %v841
    %v1339 = vpop.xlane.xlu0 %1338
    %1340 = vmax.xlane.f32.xlu0 %v846
    %v1341 = vpop.xlane.xlu0 %1340
    %1342 = vmax.xlane.f32.xlu0 %v851
    %v1343 = vpop.xlane.xlu0 %1342
    %1344 = vmax.xlane.f32.xlu0 %v856
    %v1345 = vpop.xlane.xlu0 %1344
    %1346 = vmax.xlane.f32.xlu0 %v861
    %v1347 = vpop.xlane.xlu0 %1346
    %1348 = vmax.xlane.f32.xlu0 %v866
    %v1349 = vpop.xlane.xlu0 %1348
    %1350 = vmax.xlane.f32.xlu0 %v871
    %v1351 = vpop.xlane.xlu0 %1350
    %1352 = vmax.xlane.f32.xlu0 %v876
    %v1353 = vpop.xlane.xlu0 %1352
    %1354 = vmax.xlane.f32.xlu0 %v881
    %v1355 = vpop.xlane.xlu0 %1354
    %1356 = vmax.xlane.f32.xlu0 %v886
    %v1357 = vpop.xlane.xlu0 %1356
    %1358 = vmax.xlane.f32.xlu0 %v891
    %v1359 = vpop.xlane.xlu0 %1358
    %1360 = vmax.xlane.f32.xlu0 %v896
    %v1361 = vpop.xlane.xlu0 %1360
    %1362 = vmax.xlane.f32.xlu0 %v901
    %v1363 = vpop.xlane.xlu0 %1362
    %1364 = vmax.xlane.f32.xlu0 %v906
    %v1365 = vpop.xlane.xlu0 %1364
    %1366 = vmax.xlane.f32.xlu0 %v911
    %v1367 = vpop.xlane.xlu0 %1366
    %1368 = vmax.xlane.f32.xlu0 %v916
    %v1369 = vpop.xlane.xlu0 %1368
    %1370 = vmax.xlane.f32.xlu0 %v921
    %v1371 = vpop.xlane.xlu0 %1370
    %1372 = vmax.xlane.f32.xlu0 %v926
    %v1373 = vpop.xlane.xlu0 %1372
    %1374 = vmax.xlane.f32.xlu0 %v931
    %v1375 = vpop.xlane.xlu0 %1374
    %1376 = vmax.xlane.f32.xlu0 %v936
    %v1377 = vpop.xlane.xlu0 %1376
    %1378 = vmax.xlane.f32.xlu0 %v941
    %v1379 = vpop.xlane.xlu0 %1378
    %1380 = vmax.xlane.f32.xlu0 %v946
    %v1381 = vpop.xlane.xlu0 %1380
    %1382 = vmax.xlane.f32.xlu0 %v951
    %v1383 = vpop.xlane.xlu0 %1382
    %1384 = vmax.xlane.f32.xlu0 %v956
    %v1385 = vpop.xlane.xlu0 %1384
    %1386 = vmax.xlane.f32.xlu0 %v961
    %v1387 = vpop.xlane.xlu0 %1386
    %1388 = vmax.xlane.f32.xlu0 %v966
    %v1389 = vpop.xlane.xlu0 %1388
    %1390 = vmax.xlane.f32.xlu0 %v971
    %v1391 = vpop.xlane.xlu0 %1390
    %1392 = vmax.xlane.f32.xlu0 %v976
    %v1393 = vpop.xlane.xlu0 %1392
    %1394 = vmax.xlane.f32.xlu0 %v981
    %v1395 = vpop.xlane.xlu0 %1394
    %1396 = vmax.xlane.f32.xlu0 %v986
    %v1397 = vpop.xlane.xlu0 %1396
    %1398 = vmax.xlane.f32.xlu0 %v991
    %v1399 = vpop.xlane.xlu0 %1398
    %1400 = vmax.xlane.f32.xlu0 %v996
    %v1401 = vpop.xlane.xlu0 %1400
    %1402 = vmax.xlane.f32.xlu0 %v1001
    %v1403 = vpop.xlane.xlu0 %1402
    %1404 = vmax.xlane.f32.xlu0 %v1006
    %v1405 = vpop.xlane.xlu0 %1404
    %1406 = vmax.xlane.f32.xlu0 %v1011
    %v1407 = vpop.xlane.xlu0 %1406
    %1408 = vmax.xlane.f32.xlu0 %v1016
    %v1409 = vpop.xlane.xlu0 %1408
    %1410 = vmax.xlane.f32.xlu0 %v1021
    %v1411 = vpop.xlane.xlu0 %1410
    %1412 = vmax.xlane.f32.xlu0 %v1026
    %v1413 = vpop.xlane.xlu0 %1412
    %1414 = vmax.xlane.f32.xlu0 %v1031
    %v1415 = vpop.xlane.xlu0 %1414
    %1416 = vmax.xlane.f32.xlu0 %v1036
    %v1417 = vpop.xlane.xlu0 %1416
    %1418 = vmax.xlane.f32.xlu0 %v1041
    %v1419 = vpop.xlane.xlu0 %1418
    %1420 = vmax.xlane.f32.xlu0 %v1046
    %v1421 = vpop.xlane.xlu0 %1420
    %1422 = vmax.xlane.f32.xlu0 %v1051
    %v1423 = vpop.xlane.xlu0 %1422
    %1424 = vmax.xlane.f32.xlu0 %v1056
    %v1425 = vpop.xlane.xlu0 %1424
    %1426 = vmax.xlane.f32.xlu0 %v1061
    %v1427 = vpop.xlane.xlu0 %1426
    %1428 = vmax.xlane.f32.xlu0 %v1066
    %v1429 = vpop.xlane.xlu0 %1428
    %1430 = vmax.xlane.f32.xlu0 %v1071
    %v1431 = vpop.xlane.xlu0 %1430
    %1432 = vmax.xlane.f32.xlu0 %v1076
    %v1433 = vpop.xlane.xlu0 %1432
    %1434 = vmax.xlane.f32.xlu0 %v1081
    %v1435 = vpop.xlane.xlu0 %1434
    %1436 = vmax.xlane.f32.xlu0 %v1086
    %v1437 = vpop.xlane.xlu0 %1436
    %1438 = vmax.xlane.f32.xlu0 %v1091
    %v1439 = vpop.xlane.xlu0 %1438
    %1440 = vmax.xlane.f32.xlu0 %v1096
    %v1441 = vpop.xlane.xlu0 %1440
    %1442 = vmax.xlane.f32.xlu0 %v1101
    %v1443 = vpop.xlane.xlu0 %1442
    %1444 = vmax.xlane.f32.xlu0 %v1106
    %v1445 = vpop.xlane.xlu0 %1444
    %1446 = vmax.xlane.f32.xlu0 %v1111
    %v1447 = vpop.xlane.xlu0 %1446
    %1448 = vmax.xlane.f32.xlu0 %v1116
    %v1449 = vpop.xlane.xlu0 %1448
    %1450 = vmax.xlane.f32.xlu0 %v1121
    %v1451 = vpop.xlane.xlu0 %1450
    %1452 = vmax.xlane.f32.xlu0 %v1126
    %v1453 = vpop.xlane.xlu0 %1452
    %1454 = vmax.xlane.f32.xlu0 %v1131
    %v1455 = vpop.xlane.xlu0 %1454
    %1456 = vmax.xlane.f32.xlu0 %v1136
    %v1457 = vpop.xlane.xlu0 %1456
    %1458 = vmax.xlane.f32.xlu0 %v1141
    %v1459 = vpop.xlane.xlu0 %1458
    %1460 = vmax.xlane.f32.xlu0 %v1146
    %v1461 = vpop.xlane.xlu0 %1460
    %1462 = vmax.xlane.f32.xlu0 %v1151
    %v1463 = vpop.xlane.xlu0 %1462
    %1464 = vmax.xlane.f32.xlu0 %v1156
    %v1465 = vpop.xlane.xlu0 %1464
    %1466 = vmax.xlane.f32.xlu0 %v1161
    %v1467 = vpop.xlane.xlu0 %1466
    %1468 = vmax.xlane.f32.xlu0 %v1166
    %v1469 = vpop.xlane.xlu0 %1468
    %1470 = vmax.xlane.f32.xlu0 %v1171
    %v1471 = vpop.xlane.xlu0 %1470
    %1472 = vmax.xlane.f32.xlu0 %v1176
    %v1473 = vpop.xlane.xlu0 %1472
    %1474 = vmax.xlane.f32.xlu0 %v1181
    %v1475 = vpop.xlane.xlu0 %1474
    %1476 = vmax.xlane.f32.xlu0 %v1186
    %v1477 = vpop.xlane.xlu0 %1476
    %1478 = vmax.xlane.f32.xlu0 %v1191
    %v1479 = vpop.xlane.xlu0 %1478
    %1480 = vmax.xlane.f32.xlu0 %v1196
    %v1481 = vpop.xlane.xlu0 %1480
    %1482 = vmax.xlane.f32.xlu0 %v1201
    %v1483 = vpop.xlane.xlu0 %1482
    %1484 = vmax.xlane.f32.xlu0 %v1206
    %v1485 = vpop.xlane.xlu0 %1484
    %1486 = vmax.xlane.f32.xlu0 %v1211
    %v1487 = vpop.xlane.xlu0 %1486
    %1488 = vmax.xlane.f32.xlu0 %v1216
    %v1489 = vpop.xlane.xlu0 %1488
    %1490 = vmax.xlane.f32.xlu0 %v1221
    %v1491 = vpop.xlane.xlu0 %1490
    %1492 = vmax.xlane.f32.xlu0 %v1226
    %v1493 = vpop.xlane.xlu0 %1492
    %1494 = vmax.xlane.f32.xlu0 %v1231
    %v1495 = vpop.xlane.xlu0 %1494
    %1496 = vmax.xlane.f32.xlu0 %v1236
    %v1497 = vpop.xlane.xlu0 %1496
    %1498 = vmax.xlane.f32.xlu0 %v1241
    %v1499 = vpop.xlane.xlu0 %1498
    %v1500 = vsub.f32 %v606, %v1245
    %v1501 = vsub.f32 %v611, %v1247
    %v1502 = vsub.f32 %v616, %v1249
    %v1503 = vsub.f32 %v621, %v1251
    %v1504 = vsub.f32 %v626, %v1253
    %v1505 = vsub.f32 %v631, %v1255
    %v1506 = vsub.f32 %v636, %v1257
    %v1507 = vsub.f32 %v641, %v1259
    %v1508 = vsub.f32 %v646, %v1261
    %v1509 = vsub.f32 %v651, %v1263
    %v1510 = vsub.f32 %v656, %v1265
    %v1511 = vsub.f32 %v661, %v1267
    %v1512 = vsub.f32 %v666, %v1269
    %v1513 = vsub.f32 %v671, %v1271
    %v1514 = vsub.f32 %v676, %v1273
    %v1515 = vsub.f32 %v681, %v1275
    %v1516 = vsub.f32 %v686, %v1277
    %v1517 = vsub.f32 %v691, %v1279
    %v1518 = vsub.f32 %v696, %v1281
    %v1519 = vsub.f32 %v701, %v1283
    %v1520 = vsub.f32 %v706, %v1285
    %v1521 = vsub.f32 %v711, %v1287
    %v1522 = vsub.f32 %v716, %v1289
    %v1523 = vsub.f32 %v721, %v1291
    %v1524 = vsub.f32 %v726, %v1293
    %v1525 = vsub.f32 %v731, %v1295
    %v1526 = vsub.f32 %v736, %v1297
    %v1527 = vsub.f32 %v741, %v1299
    %v1528 = vsub.f32 %v746, %v1301
    %v1529 = vsub.f32 %v751, %v1303
    %v1530 = vsub.f32 %v756, %v1305
    %v1531 = vsub.f32 %v761, %v1307
    %v1532 = vsub.f32 %v766, %v1309
    %v1533 = vsub.f32 %v771, %v1311
    %v1534 = vsub.f32 %v776, %v1313
    %v1535 = vsub.f32 %v781, %v1315
    %v1536 = vsub.f32 %v786, %v1317
    %v1537 = vsub.f32 %v791, %v1319
    %v1538 = vsub.f32 %v796, %v1321
    %v1539 = vsub.f32 %v801, %v1323
    %v1540 = vsub.f32 %v806, %v1325
    %v1541 = vsub.f32 %v811, %v1327
    %v1542 = vsub.f32 %v816, %v1329
    %v1543 = vsub.f32 %v821, %v1331
    %v1544 = vsub.f32 %v826, %v1333
    %v1545 = vsub.f32 %v831, %v1335
    %v1546 = vsub.f32 %v836, %v1337
    %v1547 = vsub.f32 %v841, %v1339
    %v1548 = vsub.f32 %v846, %v1341
    %v1549 = vsub.f32 %v851, %v1343
    %v1550 = vsub.f32 %v856, %v1345
    %v1551 = vsub.f32 %v861, %v1347
    %v1552 = vsub.f32 %v866, %v1349
    %v1553 = vsub.f32 %v871, %v1351
    %v1554 = vsub.f32 %v876, %v1353
    %v1555 = vsub.f32 %v881, %v1355
    %v1556 = vsub.f32 %v886, %v1357
    %v1557 = vsub.f32 %v891, %v1359
    %v1558 = vsub.f32 %v896, %v1361
    %v1559 = vsub.f32 %v901, %v1363
    %v1560 = vsub.f32 %v906, %v1365
    %v1561 = vsub.f32 %v911, %v1367
    %v1562 = vsub.f32 %v916, %v1369
    %v1563 = vsub.f32 %v921, %v1371
    %v1564 = vsub.f32 %v926, %v1373
    %v1565 = vsub.f32 %v931, %v1375
    %v1566 = vsub.f32 %v936, %v1377
    %v1567 = vsub.f32 %v941, %v1379
    %v1568 = vsub.f32 %v946, %v1381
    %v1569 = vsub.f32 %v951, %v1383
    %v1570 = vsub.f32 %v956, %v1385
    %v1571 = vsub.f32 %v961, %v1387
    %v1572 = vsub.f32 %v966, %v1389
    %v1573 = vsub.f32 %v971, %v1391
    %v1574 = vsub.f32 %v976, %v1393
    %v1575 = vsub.f32 %v981, %v1395
    %v1576 = vsub.f32 %v986, %v1397
    %v1577 = vsub.f32 %v991, %v1399
    %v1578 = vsub.f32 %v996, %v1401
    %v1579 = vsub.f32 %v1001, %v1403
    %v1580 = vsub.f32 %v1006, %v1405
    %v1581 = vsub.f32 %v1011, %v1407
    %v1582 = vsub.f32 %v1016, %v1409
    %v1583 = vsub.f32 %v1021, %v1411
    %v1584 = vsub.f32 %v1026, %v1413
    %v1585 = vsub.f32 %v1031, %v1415
    %v1586 = vsub.f32 %v1036, %v1417
    %v1587 = vsub.f32 %v1041, %v1419
    %v1588 = vsub.f32 %v1046, %v1421
    %v1589 = vsub.f32 %v1051, %v1423
    %v1590 = vsub.f32 %v1056, %v1425
    %v1591 = vsub.f32 %v1061, %v1427
    %v1592 = vsub.f32 %v1066, %v1429
    %v1593 = vsub.f32 %v1071, %v1431
    %v1594 = vsub.f32 %v1076, %v1433
    %v1595 = vsub.f32 %v1081, %v1435
    %v1596 = vsub.f32 %v1086, %v1437
    %v1597 = vsub.f32 %v1091, %v1439
    %v1598 = vsub.f32 %v1096, %v1441
    %v1599 = vsub.f32 %v1101, %v1443
    %v1600 = vsub.f32 %v1106, %v1445
    %v1601 = vsub.f32 %v1111, %v1447
    %v1602 = vsub.f32 %v1116, %v1449
    %v1603 = vsub.f32 %v1121, %v1451
    %v1604 = vsub.f32 %v1126, %v1453
    %v1605 = vsub.f32 %v1131, %v1455
    %v1606 = vsub.f32 %v1136, %v1457
    %v1607 = vsub.f32 %v1141, %v1459
    %v1608 = vsub.f32 %v1146, %v1461
    %v1609 = vsub.f32 %v1151, %v1463
    %v1610 = vsub.f32 %v1156, %v1465
    %v1611 = vsub.f32 %v1161, %v1467
    %v1612 = vsub.f32 %v1166, %v1469
    %v1613 = vsub.f32 %v1171, %v1471
    %v1614 = vsub.f32 %v1176, %v1473
    %v1615 = vsub.f32 %v1181, %v1475
    %v1616 = vsub.f32 %v1186, %v1477
    %v1617 = vsub.f32 %v1191, %v1479
    %v1618 = vsub.f32 %v1196, %v1481
    %v1619 = vsub.f32 %v1201, %v1483
    %v1620 = vsub.f32 %v1206, %v1485
    %v1621 = vsub.f32 %v1211, %v1487
    %v1622 = vsub.f32 %v1216, %v1489
    %v1623 = vsub.f32 %v1221, %v1491
    %v1624 = vsub.f32 %v1226, %v1493
    %v1625 = vsub.f32 %v1231, %v1495
    %v1626 = vsub.f32 %v1236, %v1497
    %v1627 = vsub.f32 %v1241, %v1499
    %v1628 = vmin.f32 %v1500, 0.0
    %v1629 = vmin.f32 %v1501, 0.0
    %v1630 = vmin.f32 %v1502, 0.0
    %v1631 = vmin.f32 %v1503, 0.0
    %v1632 = vmin.f32 %v1504, 0.0
    %v1633 = vmin.f32 %v1505, 0.0
    %v1634 = vmin.f32 %v1506, 0.0
    %v1635 = vmin.f32 %v1507, 0.0
    %v1636 = vmin.f32 %v1508, 0.0
    %v1637 = vmin.f32 %v1509, 0.0
    %v1638 = vmin.f32 %v1510, 0.0
    %v1639 = vmin.f32 %v1511, 0.0
    %v1640 = vmin.f32 %v1512, 0.0
    %v1641 = vmin.f32 %v1513, 0.0
    %v1642 = vmin.f32 %v1514, 0.0
    %v1643 = vmin.f32 %v1515, 0.0
    %v1644 = vmin.f32 %v1516, 0.0
    %v1645 = vmin.f32 %v1517, 0.0
    %v1646 = vmin.f32 %v1518, 0.0
    %v1647 = vmin.f32 %v1519, 0.0
    %v1648 = vmin.f32 %v1520, 0.0
    %v1649 = vmin.f32 %v1521, 0.0
    %v1650 = vmin.f32 %v1522, 0.0
    %v1651 = vmin.f32 %v1523, 0.0
    %v1652 = vmin.f32 %v1524, 0.0
    %v1653 = vmin.f32 %v1525, 0.0
    %v1654 = vmin.f32 %v1526, 0.0
    %v1655 = vmin.f32 %v1527, 0.0
    %v1656 = vmin.f32 %v1528, 0.0
    %v1657 = vmin.f32 %v1529, 0.0
    %v1658 = vmin.f32 %v1530, 0.0
    %v1659 = vmin.f32 %v1531, 0.0
    %v1660 = vmin.f32 %v1532, 0.0
    %v1661 = vmin.f32 %v1533, 0.0
    %v1662 = vmin.f32 %v1534, 0.0
    %v1663 = vmin.f32 %v1535, 0.0
    %v1664 = vmin.f32 %v1536, 0.0
    %v1665 = vmin.f32 %v1537, 0.0
    %v1666 = vmin.f32 %v1538, 0.0
    %v1667 = vmin.f32 %v1539, 0.0
    %v1668 = vmin.f32 %v1540, 0.0
    %v1669 = vmin.f32 %v1541, 0.0
    %v1670 = vmin.f32 %v1542, 0.0
    %v1671 = vmin.f32 %v1543, 0.0
    %v1672 = vmin.f32 %v1544, 0.0
    %v1673 = vmin.f32 %v1545, 0.0
    %v1674 = vmin.f32 %v1546, 0.0
    %v1675 = vmin.f32 %v1547, 0.0
    %v1676 = vmin.f32 %v1548, 0.0
    %v1677 = vmin.f32 %v1549, 0.0
    %v1678 = vmin.f32 %v1550, 0.0
    %v1679 = vmin.f32 %v1551, 0.0
    %v1680 = vmin.f32 %v1552, 0.0
    %v1681 = vmin.f32 %v1553, 0.0
    %v1682 = vmin.f32 %v1554, 0.0
    %v1683 = vmin.f32 %v1555, 0.0
    %v1684 = vmin.f32 %v1556, 0.0
    %v1685 = vmin.f32 %v1557, 0.0
    %v1686 = vmin.f32 %v1558, 0.0
    %v1687 = vmin.f32 %v1559, 0.0
    %v1688 = vmin.f32 %v1560, 0.0
    %v1689 = vmin.f32 %v1561, 0.0
    %v1690 = vmin.f32 %v1562, 0.0
    %v1691 = vmin.f32 %v1563, 0.0
    %v1692 = vmin.f32 %v1564, 0.0
    %v1693 = vmin.f32 %v1565, 0.0
    %v1694 = vmin.f32 %v1566, 0.0
    %v1695 = vmin.f32 %v1567, 0.0
    %v1696 = vmin.f32 %v1568, 0.0
    %v1697 = vmin.f32 %v1569, 0.0
    %v1698 = vmin.f32 %v1570, 0.0
    %v1699 = vmin.f32 %v1571, 0.0
    %v1700 = vmin.f32 %v1572, 0.0
    %v1701 = vmin.f32 %v1573, 0.0
    %v1702 = vmin.f32 %v1574, 0.0
    %v1703 = vmin.f32 %v1575, 0.0
    %v1704 = vmin.f32 %v1576, 0.0
    %v1705 = vmin.f32 %v1577, 0.0
    %v1706 = vmin.f32 %v1578, 0.0
    %v1707 = vmin.f32 %v1579, 0.0
    %v1708 = vmin.f32 %v1580, 0.0
    %v1709 = vmin.f32 %v1581, 0.0
    %v1710 = vmin.f32 %v1582, 0.0
    %v1711 = vmin.f32 %v1583, 0.0
    %v1712 = vmin.f32 %v1584, 0.0
    %v1713 = vmin.f32 %v1585, 0.0
    %v1714 = vmin.f32 %v1586, 0.0
    %v1715 = vmin.f32 %v1587, 0.0
    %v1716 = vmin.f32 %v1588, 0.0
    %v1717 = vmin.f32 %v1589, 0.0
    %v1718 = vmin.f32 %v1590, 0.0
    %v1719 = vmin.f32 %v1591, 0.0
    %v1720 = vmin.f32 %v1592, 0.0
    %v1721 = vmin.f32 %v1593, 0.0
    %v1722 = vmin.f32 %v1594, 0.0
    %v1723 = vmin.f32 %v1595, 0.0
    %v1724 = vmin.f32 %v1596, 0.0
    %v1725 = vmin.f32 %v1597, 0.0
    %v1726 = vmin.f32 %v1598, 0.0
    %v1727 = vmin.f32 %v1599, 0.0
    %v1728 = vmin.f32 %v1600, 0.0
    %v1729 = vmin.f32 %v1601, 0.0
    %v1730 = vmin.f32 %v1602, 0.0
    %v1731 = vmin.f32 %v1603, 0.0
    %v1732 = vmin.f32 %v1604, 0.0
    %v1733 = vmin.f32 %v1605, 0.0
    %v1734 = vmin.f32 %v1606, 0.0
    %v1735 = vmin.f32 %v1607, 0.0
    %v1736 = vmin.f32 %v1608, 0.0
    %v1737 = vmin.f32 %v1609, 0.0
    %v1738 = vmin.f32 %v1610, 0.0
    %v1739 = vmin.f32 %v1611, 0.0
    %v1740 = vmin.f32 %v1612, 0.0
    %v1741 = vmin.f32 %v1613, 0.0
    %v1742 = vmin.f32 %v1614, 0.0
    %v1743 = vmin.f32 %v1615, 0.0
    %v1744 = vmin.f32 %v1616, 0.0
    %v1745 = vmin.f32 %v1617, 0.0
    %v1746 = vmin.f32 %v1618, 0.0
    %v1747 = vmin.f32 %v1619, 0.0
    %v1748 = vmin.f32 %v1620, 0.0
    %v1749 = vmin.f32 %v1621, 0.0
    %v1750 = vmin.f32 %v1622, 0.0
    %v1751 = vmin.f32 %v1623, 0.0
    %v1752 = vmin.f32 %v1624, 0.0
    %v1753 = vmin.f32 %v1625, 0.0
    %v1754 = vmin.f32 %v1626, 0.0
    %v1755 = vmin.f32 %v1627, 0.0
    %v1756 = vmul.f32 %v1628, 1.442695
    %v1757 = vpow.pop %v1756
    %v1758 = vmul.f32 %v1629, 1.442695
    %v1759 = vpow.pop %v1758
    %v1760 = vmul.f32 %v1630, 1.442695
    %v1761 = vpow.pop %v1760
    %v1762 = vmul.f32 %v1631, 1.442695
    %v1763 = vpow.pop %v1762
    %v1764 = vmul.f32 %v1632, 1.442695
    %v1765 = vpow.pop %v1764
    %v1766 = vmul.f32 %v1633, 1.442695
    %v1767 = vpow.pop %v1766
    %v1768 = vmul.f32 %v1634, 1.442695
    %v1769 = vpow.pop %v1768
    %v1770 = vmul.f32 %v1635, 1.442695
    %v1771 = vpow.pop %v1770
    %v1772 = vmul.f32 %v1636, 1.442695
    %v1773 = vpow.pop %v1772
    %v1774 = vmul.f32 %v1637, 1.442695
    %v1775 = vpow.pop %v1774
    %v1776 = vmul.f32 %v1638, 1.442695
    %v1777 = vpow.pop %v1776
    %v1778 = vmul.f32 %v1639, 1.442695
    %v1779 = vpow.pop %v1778
    %v1780 = vmul.f32 %v1640, 1.442695
    %v1781 = vpow.pop %v1780
    %v1782 = vmul.f32 %v1641, 1.442695
    %v1783 = vpow.pop %v1782
    %v1784 = vmul.f32 %v1642, 1.442695
    %v1785 = vpow.pop %v1784
    %v1786 = vmul.f32 %v1643, 1.442695
    %v1787 = vpow.pop %v1786
    %v1788 = vmul.f32 %v1644, 1.442695
    %v1789 = vpow.pop %v1788
    %v1790 = vmul.f32 %v1645, 1.442695
    %v1791 = vpow.pop %v1790
    %v1792 = vmul.f32 %v1646, 1.442695
    %v1793 = vpow.pop %v1792
    %v1794 = vmul.f32 %v1647, 1.442695
    %v1795 = vpow.pop %v1794
    %v1796 = vmul.f32 %v1648, 1.442695
    %v1797 = vpow.pop %v1796
    %v1798 = vmul.f32 %v1649, 1.442695
    %v1799 = vpow.pop %v1798
    %v1800 = vmul.f32 %v1650, 1.442695
    %v1801 = vpow.pop %v1800
    %v1802 = vmul.f32 %v1651, 1.442695
    %v1803 = vpow.pop %v1802
    %v1804 = vmul.f32 %v1652, 1.442695
    %v1805 = vpow.pop %v1804
    %v1806 = vmul.f32 %v1653, 1.442695
    %v1807 = vpow.pop %v1806
    %v1808 = vmul.f32 %v1654, 1.442695
    %v1809 = vpow.pop %v1808
    %v1810 = vmul.f32 %v1655, 1.442695
    %v1811 = vpow.pop %v1810
    %v1812 = vmul.f32 %v1656, 1.442695
    %v1813 = vpow.pop %v1812
    %v1814 = vmul.f32 %v1657, 1.442695
    %v1815 = vpow.pop %v1814
    %v1816 = vmul.f32 %v1658, 1.442695
    %v1817 = vpow.pop %v1816
    %v1818 = vmul.f32 %v1659, 1.442695
    %v1819 = vpow.pop %v1818
    %v1820 = vmul.f32 %v1660, 1.442695
    %v1821 = vpow.pop %v1820
    %v1822 = vmul.f32 %v1661, 1.442695
    %v1823 = vpow.pop %v1822
    %v1824 = vmul.f32 %v1662, 1.442695
    %v1825 = vpow.pop %v1824
    %v1826 = vmul.f32 %v1663, 1.442695
    %v1827 = vpow.pop %v1826
    %v1828 = vmul.f32 %v1664, 1.442695
    %v1829 = vpow.pop %v1828
    %v1830 = vmul.f32 %v1665, 1.442695
    %v1831 = vpow.pop %v1830
    %v1832 = vmul.f32 %v1666, 1.442695
    %v1833 = vpow.pop %v1832
    %v1834 = vmul.f32 %v1667, 1.442695
    %v1835 = vpow.pop %v1834
    %v1836 = vmul.f32 %v1668, 1.442695
    %v1837 = vpow.pop %v1836
    %v1838 = vmul.f32 %v1669, 1.442695
    %v1839 = vpow.pop %v1838
    %v1840 = vmul.f32 %v1670, 1.442695
    %v1841 = vpow.pop %v1840
    %v1842 = vmul.f32 %v1671, 1.442695
    %v1843 = vpow.pop %v1842
    %v1844 = vmul.f32 %v1672, 1.442695
    %v1845 = vpow.pop %v1844
    %v1846 = vmul.f32 %v1673, 1.442695
    %v1847 = vpow.pop %v1846
    %v1848 = vmul.f32 %v1674, 1.442695
    %v1849 = vpow.pop %v1848
    %v1850 = vmul.f32 %v1675, 1.442695
    %v1851 = vpow.pop %v1850
    %v1852 = vmul.f32 %v1676, 1.442695
    %v1853 = vpow.pop %v1852
    %v1854 = vmul.f32 %v1677, 1.442695
    %v1855 = vpow.pop %v1854
    %v1856 = vmul.f32 %v1678, 1.442695
    %v1857 = vpow.pop %v1856
    %v1858 = vmul.f32 %v1679, 1.442695
    %v1859 = vpow.pop %v1858
    %v1860 = vmul.f32 %v1680, 1.442695
    %v1861 = vpow.pop %v1860
    %v1862 = vmul.f32 %v1681, 1.442695
    %v1863 = vpow.pop %v1862
    %v1864 = vmul.f32 %v1682, 1.442695
    %v1865 = vpow.pop %v1864
    %v1866 = vmul.f32 %v1683, 1.442695
    %v1867 = vpow.pop %v1866
    %v1868 = vmul.f32 %v1684, 1.442695
    %v1869 = vpow.pop %v1868
    %v1870 = vmul.f32 %v1685, 1.442695
    %v1871 = vpow.pop %v1870
    %v1872 = vmul.f32 %v1686, 1.442695
    %v1873 = vpow.pop %v1872
    %v1874 = vmul.f32 %v1687, 1.442695
    %v1875 = vpow.pop %v1874
    %v1876 = vmul.f32 %v1688, 1.442695
    %v1877 = vpow.pop %v1876
    %v1878 = vmul.f32 %v1689, 1.442695
    %v1879 = vpow.pop %v1878
    %v1880 = vmul.f32 %v1690, 1.442695
    %v1881 = vpow.pop %v1880
    %v1882 = vmul.f32 %v1691, 1.442695
    %v1883 = vpow.pop %v1882
    %v1884 = vmul.f32 %v1692, 1.442695
    %v1885 = vpow.pop %v1884
    %v1886 = vmul.f32 %v1693, 1.442695
    %v1887 = vpow.pop %v1886
    %v1888 = vmul.f32 %v1694, 1.442695
    %v1889 = vpow.pop %v1888
    %v1890 = vmul.f32 %v1695, 1.442695
    %v1891 = vpow.pop %v1890
    %v1892 = vmul.f32 %v1696, 1.442695
    %v1893 = vpow.pop %v1892
    %v1894 = vmul.f32 %v1697, 1.442695
    %v1895 = vpow.pop %v1894
    %v1896 = vmul.f32 %v1698, 1.442695
    %v1897 = vpow.pop %v1896
    %v1898 = vmul.f32 %v1699, 1.442695
    %v1899 = vpow.pop %v1898
    %v1900 = vmul.f32 %v1700, 1.442695
    %v1901 = vpow.pop %v1900
    %v1902 = vmul.f32 %v1701, 1.442695
    %v1903 = vpow.pop %v1902
    %v1904 = vmul.f32 %v1702, 1.442695
    %v1905 = vpow.pop %v1904
    %v1906 = vmul.f32 %v1703, 1.442695
    %v1907 = vpow.pop %v1906
    %v1908 = vmul.f32 %v1704, 1.442695
    %v1909 = vpow.pop %v1908
    %v1910 = vmul.f32 %v1705, 1.442695
    %v1911 = vpow.pop %v1910
    %v1912 = vmul.f32 %v1706, 1.442695
    %v1913 = vpow.pop %v1912
    %v1914 = vmul.f32 %v1707, 1.442695
    %v1915 = vpow.pop %v1914
    %v1916 = vmul.f32 %v1708, 1.442695
    %v1917 = vpow.pop %v1916
    %v1918 = vmul.f32 %v1709, 1.442695
    %v1919 = vpow.pop %v1918
    %v1920 = vmul.f32 %v1710, 1.442695
    %v1921 = vpow.pop %v1920
    %v1922 = vmul.f32 %v1711, 1.442695
    %v1923 = vpow.pop %v1922
    %v1924 = vmul.f32 %v1712, 1.442695
    %v1925 = vpow.pop %v1924
    %v1926 = vmul.f32 %v1713, 1.442695
    %v1927 = vpow.pop %v1926
    %v1928 = vmul.f32 %v1714, 1.442695
    %v1929 = vpow.pop %v1928
    %v1930 = vmul.f32 %v1715, 1.442695
    %v1931 = vpow.pop %v1930
    %v1932 = vmul.f32 %v1716, 1.442695
    %v1933 = vpow.pop %v1932
    %v1934 = vmul.f32 %v1717, 1.442695
    %v1935 = vpow.pop %v1934
    %v1936 = vmul.f32 %v1718, 1.442695
    %v1937 = vpow.pop %v1936
    %v1938 = vmul.f32 %v1719, 1.442695
    %v1939 = vpow.pop %v1938
    %v1940 = vmul.f32 %v1720, 1.442695
    %v1941 = vpow.pop %v1940
    %v1942 = vmul.f32 %v1721, 1.442695
    %v1943 = vpow.pop %v1942
    %v1944 = vmul.f32 %v1722, 1.442695
    %v1945 = vpow.pop %v1944
    %v1946 = vmul.f32 %v1723, 1.442695
    %v1947 = vpow.pop %v1946
    %v1948 = vmul.f32 %v1724, 1.442695
    %v1949 = vpow.pop %v1948
    %v1950 = vmul.f32 %v1725, 1.442695
    %v1951 = vpow.pop %v1950
    %v1952 = vmul.f32 %v1726, 1.442695
    %v1953 = vpow.pop %v1952
    %v1954 = vmul.f32 %v1727, 1.442695
    %v1955 = vpow.pop %v1954
    %v1956 = vmul.f32 %v1728, 1.442695
    %v1957 = vpow.pop %v1956
    %v1958 = vmul.f32 %v1729, 1.442695
    %v1959 = vpow.pop %v1958
    %v1960 = vmul.f32 %v1730, 1.442695
    %v1961 = vpow.pop %v1960
    %v1962 = vmul.f32 %v1731, 1.442695
    %v1963 = vpow.pop %v1962
    %v1964 = vmul.f32 %v1732, 1.442695
    %v1965 = vpow.pop %v1964
    %v1966 = vmul.f32 %v1733, 1.442695
    %v1967 = vpow.pop %v1966
    %v1968 = vmul.f32 %v1734, 1.442695
    %v1969 = vpow.pop %v1968
    %v1970 = vmul.f32 %v1735, 1.442695
    %v1971 = vpow.pop %v1970
    %v1972 = vmul.f32 %v1736, 1.442695
    %v1973 = vpow.pop %v1972
    %v1974 = vmul.f32 %v1737, 1.442695
    %v1975 = vpow.pop %v1974
    %v1976 = vmul.f32 %v1738, 1.442695
    %v1977 = vpow.pop %v1976
    %v1978 = vmul.f32 %v1739, 1.442695
    %v1979 = vpow.pop %v1978
    %v1980 = vmul.f32 %v1740, 1.442695
    %v1981 = vpow.pop %v1980
    %v1982 = vmul.f32 %v1741, 1.442695
    %v1983 = vpow.pop %v1982
    %v1984 = vmul.f32 %v1742, 1.442695
    %v1985 = vpow.pop %v1984
    %v1986 = vmul.f32 %v1743, 1.442695
    %v1987 = vpow.pop %v1986
    %v1988 = vmul.f32 %v1744, 1.442695
    %v1989 = vpow.pop %v1988
    %v1990 = vmul.f32 %v1745, 1.442695
    %v1991 = vpow.pop %v1990
    %v1992 = vmul.f32 %v1746, 1.442695
    %v1993 = vpow.pop %v1992
    %v1994 = vmul.f32 %v1747, 1.442695
    %v1995 = vpow.pop %v1994
    %v1996 = vmul.f32 %v1748, 1.442695
    %v1997 = vpow.pop %v1996
    %v1998 = vmul.f32 %v1749, 1.442695
    %v1999 = vpow.pop %v1998
    %v2000 = vmul.f32 %v1750, 1.442695
    %v2001 = vpow.pop %v2000
    %v2002 = vmul.f32 %v1751, 1.442695
    %v2003 = vpow.pop %v2002
    %v2004 = vmul.f32 %v1752, 1.442695
    %v2005 = vpow.pop %v2004
    %v2006 = vmul.f32 %v1753, 1.442695
    %v2007 = vpow.pop %v2006
    %v2008 = vmul.f32 %v1754, 1.442695
    %v2009 = vpow.pop %v2008
    %v2010 = vmul.f32 %v1755, 1.442695
    %v2011 = vpow.pop %v2010
    %2012 = vadd.xlane.f32.xlu0 %v1757
    %v2013 = vpop.xlane.xlu0 %2012
    %2014 = vadd.xlane.f32.xlu0 %v1759
    %v2015 = vpop.xlane.xlu0 %2014
    %2016 = vadd.xlane.f32.xlu0 %v1761
    %v2017 = vpop.xlane.xlu0 %2016
    %2018 = vadd.xlane.f32.xlu0 %v1763
    %v2019 = vpop.xlane.xlu0 %2018
    %2020 = vadd.xlane.f32.xlu0 %v1765
    %v2021 = vpop.xlane.xlu0 %2020
    %2022 = vadd.xlane.f32.xlu0 %v1767
    %v2023 = vpop.xlane.xlu0 %2022
    %2024 = vadd.xlane.f32.xlu0 %v1769
    %v2025 = vpop.xlane.xlu0 %2024
    %2026 = vadd.xlane.f32.xlu0 %v1771
    %v2027 = vpop.xlane.xlu0 %2026
    %2028 = vadd.xlane.f32.xlu0 %v1773
    %v2029 = vpop.xlane.xlu0 %2028
    %2030 = vadd.xlane.f32.xlu0 %v1775
    %v2031 = vpop.xlane.xlu0 %2030
    %2032 = vadd.xlane.f32.xlu0 %v1777
    %v2033 = vpop.xlane.xlu0 %2032
    %2034 = vadd.xlane.f32.xlu0 %v1779
    %v2035 = vpop.xlane.xlu0 %2034
    %2036 = vadd.xlane.f32.xlu0 %v1781
    %v2037 = vpop.xlane.xlu0 %2036
    %2038 = vadd.xlane.f32.xlu0 %v1783
    %v2039 = vpop.xlane.xlu0 %2038
    %2040 = vadd.xlane.f32.xlu0 %v1785
    %v2041 = vpop.xlane.xlu0 %2040
    %2042 = vadd.xlane.f32.xlu0 %v1787
    %v2043 = vpop.xlane.xlu0 %2042
    %2044 = vadd.xlane.f32.xlu0 %v1789
    %v2045 = vpop.xlane.xlu0 %2044
    %2046 = vadd.xlane.f32.xlu0 %v1791
    %v2047 = vpop.xlane.xlu0 %2046
    %2048 = vadd.xlane.f32.xlu0 %v1793
    %v2049 = vpop.xlane.xlu0 %2048
    %2050 = vadd.xlane.f32.xlu0 %v1795
    %v2051 = vpop.xlane.xlu0 %2050
    %2052 = vadd.xlane.f32.xlu0 %v1797
    %v2053 = vpop.xlane.xlu0 %2052
    %2054 = vadd.xlane.f32.xlu0 %v1799
    %v2055 = vpop.xlane.xlu0 %2054
    %2056 = vadd.xlane.f32.xlu0 %v1801
    %v2057 = vpop.xlane.xlu0 %2056
    %2058 = vadd.xlane.f32.xlu0 %v1803
    %v2059 = vpop.xlane.xlu0 %2058
    %2060 = vadd.xlane.f32.xlu0 %v1805
    %v2061 = vpop.xlane.xlu0 %2060
    %2062 = vadd.xlane.f32.xlu0 %v1807
    %v2063 = vpop.xlane.xlu0 %2062
    %2064 = vadd.xlane.f32.xlu0 %v1809
    %v2065 = vpop.xlane.xlu0 %2064
    %2066 = vadd.xlane.f32.xlu0 %v1811
    %v2067 = vpop.xlane.xlu0 %2066
    %2068 = vadd.xlane.f32.xlu0 %v1813
    %v2069 = vpop.xlane.xlu0 %2068
    %2070 = vadd.xlane.f32.xlu0 %v1815
    %v2071 = vpop.xlane.xlu0 %2070
    %2072 = vadd.xlane.f32.xlu0 %v1817
    %v2073 = vpop.xlane.xlu0 %2072
    %2074 = vadd.xlane.f32.xlu0 %v1819
    %v2075 = vpop.xlane.xlu0 %2074
    %2076 = vadd.xlane.f32.xlu0 %v1821
    %v2077 = vpop.xlane.xlu0 %2076
    %2078 = vadd.xlane.f32.xlu0 %v1823
    %v2079 = vpop.xlane.xlu0 %2078
    %2080 = vadd.xlane.f32.xlu0 %v1825
    %v2081 = vpop.xlane.xlu0 %2080
    %2082 = vadd.xlane.f32.xlu0 %v1827
    %v2083 = vpop.xlane.xlu0 %2082
    %2084 = vadd.xlane.f32.xlu0 %v1829
    %v2085 = vpop.xlane.xlu0 %2084
    %2086 = vadd.xlane.f32.xlu0 %v1831
    %v2087 = vpop.xlane.xlu0 %2086
    %2088 = vadd.xlane.f32.xlu0 %v1833
    %v2089 = vpop.xlane.xlu0 %2088
    %2090 = vadd.xlane.f32.xlu0 %v1835
    %v2091 = vpop.xlane.xlu0 %2090
    %2092 = vadd.xlane.f32.xlu0 %v1837
    %v2093 = vpop.xlane.xlu0 %2092
    %2094 = vadd.xlane.f32.xlu0 %v1839
    %v2095 = vpop.xlane.xlu0 %2094
    %2096 = vadd.xlane.f32.xlu0 %v1841
    %v2097 = vpop.xlane.xlu0 %2096
    %2098 = vadd.xlane.f32.xlu0 %v1843
    %v2099 = vpop.xlane.xlu0 %2098
    %2100 = vadd.xlane.f32.xlu0 %v1845
    %v2101 = vpop.xlane.xlu0 %2100
    %2102 = vadd.xlane.f32.xlu0 %v1847
    %v2103 = vpop.xlane.xlu0 %2102
    %2104 = vadd.xlane.f32.xlu0 %v1849
    %v2105 = vpop.xlane.xlu0 %2104
    %2106 = vadd.xlane.f32.xlu0 %v1851
    %v2107 = vpop.xlane.xlu0 %2106
    %2108 = vadd.xlane.f32.xlu0 %v1853
    %v2109 = vpop.xlane.xlu0 %2108
    %2110 = vadd.xlane.f32.xlu0 %v1855
    %v2111 = vpop.xlane.xlu0 %2110
    %2112 = vadd.xlane.f32.xlu0 %v1857
    %v2113 = vpop.xlane.xlu0 %2112
    %2114 = vadd.xlane.f32.xlu0 %v1859
    %v2115 = vpop.xlane.xlu0 %2114
    %2116 = vadd.xlane.f32.xlu0 %v1861
    %v2117 = vpop.xlane.xlu0 %2116
    %2118 = vadd.xlane.f32.xlu0 %v1863
    %v2119 = vpop.xlane.xlu0 %2118
    %2120 = vadd.xlane.f32.xlu0 %v1865
    %v2121 = vpop.xlane.xlu0 %2120
    %2122 = vadd.xlane.f32.xlu0 %v1867
    %v2123 = vpop.xlane.xlu0 %2122
    %2124 = vadd.xlane.f32.xlu0 %v1869
    %v2125 = vpop.xlane.xlu0 %2124
    %2126 = vadd.xlane.f32.xlu0 %v1871
    %v2127 = vpop.xlane.xlu0 %2126
    %2128 = vadd.xlane.f32.xlu0 %v1873
    %v2129 = vpop.xlane.xlu0 %2128
    %2130 = vadd.xlane.f32.xlu0 %v1875
    %v2131 = vpop.xlane.xlu0 %2130
    %2132 = vadd.xlane.f32.xlu0 %v1877
    %v2133 = vpop.xlane.xlu0 %2132
    %2134 = vadd.xlane.f32.xlu0 %v1879
    %v2135 = vpop.xlane.xlu0 %2134
    %2136 = vadd.xlane.f32.xlu0 %v1881
    %v2137 = vpop.xlane.xlu0 %2136
    %2138 = vadd.xlane.f32.xlu0 %v1883
    %v2139 = vpop.xlane.xlu0 %2138
    %2140 = vadd.xlane.f32.xlu0 %v1885
    %v2141 = vpop.xlane.xlu0 %2140
    %2142 = vadd.xlane.f32.xlu0 %v1887
    %v2143 = vpop.xlane.xlu0 %2142
    %2144 = vadd.xlane.f32.xlu0 %v1889
    %v2145 = vpop.xlane.xlu0 %2144
    %2146 = vadd.xlane.f32.xlu0 %v1891
    %v2147 = vpop.xlane.xlu0 %2146
    %2148 = vadd.xlane.f32.xlu0 %v1893
    %v2149 = vpop.xlane.xlu0 %2148
    %2150 = vadd.xlane.f32.xlu0 %v1895
    %v2151 = vpop.xlane.xlu0 %2150
    %2152 = vadd.xlane.f32.xlu0 %v1897
    %v2153 = vpop.xlane.xlu0 %2152
    %2154 = vadd.xlane.f32.xlu0 %v1899
    %v2155 = vpop.xlane.xlu0 %2154
    %2156 = vadd.xlane.f32.xlu0 %v1901
    %v2157 = vpop.xlane.xlu0 %2156
    %2158 = vadd.xlane.f32.xlu0 %v1903
    %v2159 = vpop.xlane.xlu0 %2158
    %2160 = vadd.xlane.f32.xlu0 %v1905
    %v2161 = vpop.xlane.xlu0 %2160
    %2162 = vadd.xlane.f32.xlu0 %v1907
    %v2163 = vpop.xlane.xlu0 %2162
    %2164 = vadd.xlane.f32.xlu0 %v1909
    %v2165 = vpop.xlane.xlu0 %2164
    %2166 = vadd.xlane.f32.xlu0 %v1911
    %v2167 = vpop.xlane.xlu0 %2166
    %2168 = vadd.xlane.f32.xlu0 %v1913
    %v2169 = vpop.xlane.xlu0 %2168
    %2170 = vadd.xlane.f32.xlu0 %v1915
    %v2171 = vpop.xlane.xlu0 %2170
    %2172 = vadd.xlane.f32.xlu0 %v1917
    %v2173 = vpop.xlane.xlu0 %2172
    %2174 = vadd.xlane.f32.xlu0 %v1919
    %v2175 = vpop.xlane.xlu0 %2174
    %2176 = vadd.xlane.f32.xlu0 %v1921
    %v2177 = vpop.xlane.xlu0 %2176
    %2178 = vadd.xlane.f32.xlu0 %v1923
    %v2179 = vpop.xlane.xlu0 %2178
    %2180 = vadd.xlane.f32.xlu0 %v1925
    %v2181 = vpop.xlane.xlu0 %2180
    %2182 = vadd.xlane.f32.xlu0 %v1927
    %v2183 = vpop.xlane.xlu0 %2182
    %2184 = vadd.xlane.f32.xlu0 %v1929
    %v2185 = vpop.xlane.xlu0 %2184
    %2186 = vadd.xlane.f32.xlu0 %v1931
    %v2187 = vpop.xlane.xlu0 %2186
    %2188 = vadd.xlane.f32.xlu0 %v1933
    %v2189 = vpop.xlane.xlu0 %2188
    %2190 = vadd.xlane.f32.xlu0 %v1935
    %v2191 = vpop.xlane.xlu0 %2190
    %2192 = vadd.xlane.f32.xlu0 %v1937
    %v2193 = vpop.xlane.xlu0 %2192
    %2194 = vadd.xlane.f32.xlu0 %v1939
    %v2195 = vpop.xlane.xlu0 %2194
    %2196 = vadd.xlane.f32.xlu0 %v1941
    %v2197 = vpop.xlane.xlu0 %2196
    %2198 = vadd.xlane.f32.xlu0 %v1943
    %v2199 = vpop.xlane.xlu0 %2198
    %2200 = vadd.xlane.f32.xlu0 %v1945
    %v2201 = vpop.xlane.xlu0 %2200
    %2202 = vadd.xlane.f32.xlu0 %v1947
    %v2203 = vpop.xlane.xlu0 %2202
    %2204 = vadd.xlane.f32.xlu0 %v1949
    %v2205 = vpop.xlane.xlu0 %2204
    %2206 = vadd.xlane.f32.xlu0 %v1951
    %v2207 = vpop.xlane.xlu0 %2206
    %2208 = vadd.xlane.f32.xlu0 %v1953
    %v2209 = vpop.xlane.xlu0 %2208
    %2210 = vadd.xlane.f32.xlu0 %v1955
    %v2211 = vpop.xlane.xlu0 %2210
    %2212 = vadd.xlane.f32.xlu0 %v1957
    %v2213 = vpop.xlane.xlu0 %2212
    %2214 = vadd.xlane.f32.xlu0 %v1959
    %v2215 = vpop.xlane.xlu0 %2214
    %2216 = vadd.xlane.f32.xlu0 %v1961
    %v2217 = vpop.xlane.xlu0 %2216
    %2218 = vadd.xlane.f32.xlu0 %v1963
    %v2219 = vpop.xlane.xlu0 %2218
    %2220 = vadd.xlane.f32.xlu0 %v1965
    %v2221 = vpop.xlane.xlu0 %2220
    %2222 = vadd.xlane.f32.xlu0 %v1967
    %v2223 = vpop.xlane.xlu0 %2222
    %2224 = vadd.xlane.f32.xlu0 %v1969
    %v2225 = vpop.xlane.xlu0 %2224
    %2226 = vadd.xlane.f32.xlu0 %v1971
    %v2227 = vpop.xlane.xlu0 %2226
    %2228 = vadd.xlane.f32.xlu0 %v1973
    %v2229 = vpop.xlane.xlu0 %2228
    %2230 = vadd.xlane.f32.xlu0 %v1975
    %v2231 = vpop.xlane.xlu0 %2230
    %2232 = vadd.xlane.f32.xlu0 %v1977
    %v2233 = vpop.xlane.xlu0 %2232
    %2234 = vadd.xlane.f32.xlu0 %v1979
    %v2235 = vpop.xlane.xlu0 %2234
    %2236 = vadd.xlane.f32.xlu0 %v1981
    %v2237 = vpop.xlane.xlu0 %2236
    %2238 = vadd.xlane.f32.xlu0 %v1983
    %v2239 = vpop.xlane.xlu0 %2238
    %2240 = vadd.xlane.f32.xlu0 %v1985
    %v2241 = vpop.xlane.xlu0 %2240
    %2242 = vadd.xlane.f32.xlu0 %v1987
    %v2243 = vpop.xlane.xlu0 %2242
    %2244 = vadd.xlane.f32.xlu0 %v1989
    %v2245 = vpop.xlane.xlu0 %2244
    %2246 = vadd.xlane.f32.xlu0 %v1991
    %v2247 = vpop.xlane.xlu0 %2246
    %2248 = vadd.xlane.f32.xlu0 %v1993
    %v2249 = vpop.xlane.xlu0 %2248
    %2250 = vadd.xlane.f32.xlu0 %v1995
    %v2251 = vpop.xlane.xlu0 %2250
    %2252 = vadd.xlane.f32.xlu0 %v1997
    %v2253 = vpop.xlane.xlu0 %2252
    %2254 = vadd.xlane.f32.xlu0 %v1999
    %v2255 = vpop.xlane.xlu0 %2254
    %2256 = vadd.xlane.f32.xlu0 %v2001
    %v2257 = vpop.xlane.xlu0 %2256
    %2258 = vadd.xlane.f32.xlu0 %v2003
    %v2259 = vpop.xlane.xlu0 %2258
    %2260 = vadd.xlane.f32.xlu0 %v2005
    %v2261 = vpop.xlane.xlu0 %2260
    %2262 = vadd.xlane.f32.xlu0 %v2007
    %v2263 = vpop.xlane.xlu0 %2262
    %2264 = vadd.xlane.f32.xlu0 %v2009
    %v2265 = vpop.xlane.xlu0 %2264
    %2266 = vadd.xlane.f32.xlu0 %v2011
    %v2267 = vpop.xlane.xlu0 %2266
    %v2268 = vlog2.pop %v2013
    %v2269 = vmul.f32 %v2268, 0.6931472
    %v2270 = vlog2.pop %v2015
    %v2271 = vmul.f32 %v2270, 0.6931472
    %v2272 = vlog2.pop %v2017
    %v2273 = vmul.f32 %v2272, 0.6931472
    %v2274 = vlog2.pop %v2019
    %v2275 = vmul.f32 %v2274, 0.6931472
    %v2276 = vlog2.pop %v2021
    %v2277 = vmul.f32 %v2276, 0.6931472
    %v2278 = vlog2.pop %v2023
    %v2279 = vmul.f32 %v2278, 0.6931472
    %v2280 = vlog2.pop %v2025
    %v2281 = vmul.f32 %v2280, 0.6931472
    %v2282 = vlog2.pop %v2027
    %v2283 = vmul.f32 %v2282, 0.6931472
    %v2284 = vlog2.pop %v2029
    %v2285 = vmul.f32 %v2284, 0.6931472
    %v2286 = vlog2.pop %v2031
    %v2287 = vmul.f32 %v2286, 0.6931472
    %v2288 = vlog2.pop %v2033
    %v2289 = vmul.f32 %v2288, 0.6931472
    %v2290 = vlog2.pop %v2035
    %v2291 = vmul.f32 %v2290, 0.6931472
    %v2292 = vlog2.pop %v2037
    %v2293 = vmul.f32 %v2292, 0.6931472
    %v2294 = vlog2.pop %v2039
    %v2295 = vmul.f32 %v2294, 0.6931472
    %v2296 = vlog2.pop %v2041
    %v2297 = vmul.f32 %v2296, 0.6931472
    %v2298 = vlog2.pop %v2043
    %v2299 = vmul.f32 %v2298, 0.6931472
    %v2300 = vlog2.pop %v2045
    %v2301 = vmul.f32 %v2300, 0.6931472
    %v2302 = vlog2.pop %v2047
    %v2303 = vmul.f32 %v2302, 0.6931472
    %v2304 = vlog2.pop %v2049
    %v2305 = vmul.f32 %v2304, 0.6931472
    %v2306 = vlog2.pop %v2051
    %v2307 = vmul.f32 %v2306, 0.6931472
    %v2308 = vlog2.pop %v2053
    %v2309 = vmul.f32 %v2308, 0.6931472
    %v2310 = vlog2.pop %v2055
    %v2311 = vmul.f32 %v2310, 0.6931472
    %v2312 = vlog2.pop %v2057
    %v2313 = vmul.f32 %v2312, 0.6931472
    %v2314 = vlog2.pop %v2059
    %v2315 = vmul.f32 %v2314, 0.6931472
    %v2316 = vlog2.pop %v2061
    %v2317 = vmul.f32 %v2316, 0.6931472
    %v2318 = vlog2.pop %v2063
    %v2319 = vmul.f32 %v2318, 0.6931472
    %v2320 = vlog2.pop %v2065
    %v2321 = vmul.f32 %v2320, 0.6931472
    %v2322 = vlog2.pop %v2067
    %v2323 = vmul.f32 %v2322, 0.6931472
    %v2324 = vlog2.pop %v2069
    %v2325 = vmul.f32 %v2324, 0.6931472
    %v2326 = vlog2.pop %v2071
    %v2327 = vmul.f32 %v2326, 0.6931472
    %v2328 = vlog2.pop %v2073
    %v2329 = vmul.f32 %v2328, 0.6931472
    %v2330 = vlog2.pop %v2075
    %v2331 = vmul.f32 %v2330, 0.6931472
    %v2332 = vlog2.pop %v2077
    %v2333 = vmul.f32 %v2332, 0.6931472
    %v2334 = vlog2.pop %v2079
    %v2335 = vmul.f32 %v2334, 0.6931472
    %v2336 = vlog2.pop %v2081
    %v2337 = vmul.f32 %v2336, 0.6931472
    %v2338 = vlog2.pop %v2083
    %v2339 = vmul.f32 %v2338, 0.6931472
    %v2340 = vlog2.pop %v2085
    %v2341 = vmul.f32 %v2340, 0.6931472
    %v2342 = vlog2.pop %v2087
    %v2343 = vmul.f32 %v2342, 0.6931472
    %v2344 = vlog2.pop %v2089
    %v2345 = vmul.f32 %v2344, 0.6931472
    %v2346 = vlog2.pop %v2091
    %v2347 = vmul.f32 %v2346, 0.6931472
    %v2348 = vlog2.pop %v2093
    %v2349 = vmul.f32 %v2348, 0.6931472
    %v2350 = vlog2.pop %v2095
    %v2351 = vmul.f32 %v2350, 0.6931472
    %v2352 = vlog2.pop %v2097
    %v2353 = vmul.f32 %v2352, 0.6931472
    %v2354 = vlog2.pop %v2099
    %v2355 = vmul.f32 %v2354, 0.6931472
    %v2356 = vlog2.pop %v2101
    %v2357 = vmul.f32 %v2356, 0.6931472
    %v2358 = vlog2.pop %v2103
    %v2359 = vmul.f32 %v2358, 0.6931472
    %v2360 = vlog2.pop %v2105
    %v2361 = vmul.f32 %v2360, 0.6931472
    %v2362 = vlog2.pop %v2107
    %v2363 = vmul.f32 %v2362, 0.6931472
    %v2364 = vlog2.pop %v2109
    %v2365 = vmul.f32 %v2364, 0.6931472
    %v2366 = vlog2.pop %v2111
    %v2367 = vmul.f32 %v2366, 0.6931472
    %v2368 = vlog2.pop %v2113
    %v2369 = vmul.f32 %v2368, 0.6931472
    %v2370 = vlog2.pop %v2115
    %v2371 = vmul.f32 %v2370, 0.6931472
    %v2372 = vlog2.pop %v2117
    %v2373 = vmul.f32 %v2372, 0.6931472
    %v2374 = vlog2.pop %v2119
    %v2375 = vmul.f32 %v2374, 0.6931472
    %v2376 = vlog2.pop %v2121
    %v2377 = vmul.f32 %v2376, 0.6931472
    %v2378 = vlog2.pop %v2123
    %v2379 = vmul.f32 %v2378, 0.6931472
    %v2380 = vlog2.pop %v2125
    %v2381 = vmul.f32 %v2380, 0.6931472
    %v2382 = vlog2.pop %v2127
    %v2383 = vmul.f32 %v2382, 0.6931472
    %v2384 = vlog2.pop %v2129
    %v2385 = vmul.f32 %v2384, 0.6931472
    %v2386 = vlog2.pop %v2131
    %v2387 = vmul.f32 %v2386, 0.6931472
    %v2388 = vlog2.pop %v2133
    %v2389 = vmul.f32 %v2388, 0.6931472
    %v2390 = vlog2.pop %v2135
    %v2391 = vmul.f32 %v2390, 0.6931472
    %v2392 = vlog2.pop %v2137
    %v2393 = vmul.f32 %v2392, 0.6931472
    %v2394 = vlog2.pop %v2139
    %v2395 = vmul.f32 %v2394, 0.6931472
    %v2396 = vlog2.pop %v2141
    %v2397 = vmul.f32 %v2396, 0.6931472
    %v2398 = vlog2.pop %v2143
    %v2399 = vmul.f32 %v2398, 0.6931472
    %v2400 = vlog2.pop %v2145
    %v2401 = vmul.f32 %v2400, 0.6931472
    %v2402 = vlog2.pop %v2147
    %v2403 = vmul.f32 %v2402, 0.6931472
    %v2404 = vlog2.pop %v2149
    %v2405 = vmul.f32 %v2404, 0.6931472
    %v2406 = vlog2.pop %v2151
    %v2407 = vmul.f32 %v2406, 0.6931472
    %v2408 = vlog2.pop %v2153
    %v2409 = vmul.f32 %v2408, 0.6931472
    %v2410 = vlog2.pop %v2155
    %v2411 = vmul.f32 %v2410, 0.6931472
    %v2412 = vlog2.pop %v2157
    %v2413 = vmul.f32 %v2412, 0.6931472
    %v2414 = vlog2.pop %v2159
    %v2415 = vmul.f32 %v2414, 0.6931472
    %v2416 = vlog2.pop %v2161
    %v2417 = vmul.f32 %v2416, 0.6931472
    %v2418 = vlog2.pop %v2163
    %v2419 = vmul.f32 %v2418, 0.6931472
    %v2420 = vlog2.pop %v2165
    %v2421 = vmul.f32 %v2420, 0.6931472
    %v2422 = vlog2.pop %v2167
    %v2423 = vmul.f32 %v2422, 0.6931472
    %v2424 = vlog2.pop %v2169
    %v2425 = vmul.f32 %v2424, 0.6931472
    %v2426 = vlog2.pop %v2171
    %v2427 = vmul.f32 %v2426, 0.6931472
    %v2428 = vlog2.pop %v2173
    %v2429 = vmul.f32 %v2428, 0.6931472
    %v2430 = vlog2.pop %v2175
    %v2431 = vmul.f32 %v2430, 0.6931472
    %v2432 = vlog2.pop %v2177
    %v2433 = vmul.f32 %v2432, 0.6931472
    %v2434 = vlog2.pop %v2179
    %v2435 = vmul.f32 %v2434, 0.6931472
    %v2436 = vlog2.pop %v2181
    %v2437 = vmul.f32 %v2436, 0.6931472
    %v2438 = vlog2.pop %v2183
    %v2439 = vmul.f32 %v2438, 0.6931472
    %v2440 = vlog2.pop %v2185
    %v2441 = vmul.f32 %v2440, 0.6931472
    %v2442 = vlog2.pop %v2187
    %v2443 = vmul.f32 %v2442, 0.6931472
    %v2444 = vlog2.pop %v2189
    %v2445 = vmul.f32 %v2444, 0.6931472
    %v2446 = vlog2.pop %v2191
    %v2447 = vmul.f32 %v2446, 0.6931472
    %v2448 = vlog2.pop %v2193
    %v2449 = vmul.f32 %v2448, 0.6931472
    %v2450 = vlog2.pop %v2195
    %v2451 = vmul.f32 %v2450, 0.6931472
    %v2452 = vlog2.pop %v2197
    %v2453 = vmul.f32 %v2452, 0.6931472
    %v2454 = vlog2.pop %v2199
    %v2455 = vmul.f32 %v2454, 0.6931472
    %v2456 = vlog2.pop %v2201
    %v2457 = vmul.f32 %v2456, 0.6931472
    %v2458 = vlog2.pop %v2203
    %v2459 = vmul.f32 %v2458, 0.6931472
    %v2460 = vlog2.pop %v2205
    %v2461 = vmul.f32 %v2460, 0.6931472
    %v2462 = vlog2.pop %v2207
    %v2463 = vmul.f32 %v2462, 0.6931472
    %v2464 = vlog2.pop %v2209
    %v2465 = vmul.f32 %v2464, 0.6931472
    %v2466 = vlog2.pop %v2211
    %v2467 = vmul.f32 %v2466, 0.6931472
    %v2468 = vlog2.pop %v2213
    %v2469 = vmul.f32 %v2468, 0.6931472
    %v2470 = vlog2.pop %v2215
    %v2471 = vmul.f32 %v2470, 0.6931472
    %v2472 = vlog2.pop %v2217
    %v2473 = vmul.f32 %v2472, 0.6931472
    %v2474 = vlog2.pop %v2219
    %v2475 = vmul.f32 %v2474, 0.6931472
    %v2476 = vlog2.pop %v2221
    %v2477 = vmul.f32 %v2476, 0.6931472
    %v2478 = vlog2.pop %v2223
    %v2479 = vmul.f32 %v2478, 0.6931472
    %v2480 = vlog2.pop %v2225
    %v2481 = vmul.f32 %v2480, 0.6931472
    %v2482 = vlog2.pop %v2227
    %v2483 = vmul.f32 %v2482, 0.6931472
    %v2484 = vlog2.pop %v2229
    %v2485 = vmul.f32 %v2484, 0.6931472
    %v2486 = vlog2.pop %v2231
    %v2487 = vmul.f32 %v2486, 0.6931472
    %v2488 = vlog2.pop %v2233
    %v2489 = vmul.f32 %v2488, 0.6931472
    %v2490 = vlog2.pop %v2235
    %v2491 = vmul.f32 %v2490, 0.6931472
    %v2492 = vlog2.pop %v2237
    %v2493 = vmul.f32 %v2492, 0.6931472
    %v2494 = vlog2.pop %v2239
    %v2495 = vmul.f32 %v2494, 0.6931472
    %v2496 = vlog2.pop %v2241
    %v2497 = vmul.f32 %v2496, 0.6931472
    %v2498 = vlog2.pop %v2243
    %v2499 = vmul.f32 %v2498, 0.6931472
    %v2500 = vlog2.pop %v2245
    %v2501 = vmul.f32 %v2500, 0.6931472
    %v2502 = vlog2.pop %v2247
    %v2503 = vmul.f32 %v2502, 0.6931472
    %v2504 = vlog2.pop %v2249
    %v2505 = vmul.f32 %v2504, 0.6931472
    %v2506 = vlog2.pop %v2251
    %v2507 = vmul.f32 %v2506, 0.6931472
    %v2508 = vlog2.pop %v2253
    %v2509 = vmul.f32 %v2508, 0.6931472
    %v2510 = vlog2.pop %v2255
    %v2511 = vmul.f32 %v2510, 0.6931472
    %v2512 = vlog2.pop %v2257
    %v2513 = vmul.f32 %v2512, 0.6931472
    %v2514 = vlog2.pop %v2259
    %v2515 = vmul.f32 %v2514, 0.6931472
    %v2516 = vlog2.pop %v2261
    %v2517 = vmul.f32 %v2516, 0.6931472
    %v2518 = vlog2.pop %v2263
    %v2519 = vmul.f32 %v2518, 0.6931472
    %v2520 = vlog2.pop %v2265
    %v2521 = vmul.f32 %v2520, 0.6931472
    %v2522 = vlog2.pop %v2267
    %v2523 = vmul.f32 %v2522, 0.6931472
    %v2524 = vsub.f32 %v1628, %v2269
    %v2525 = vsub.f32 %v1629, %v2271
    %v2526 = vsub.f32 %v1630, %v2273
    %v2527 = vsub.f32 %v1631, %v2275
    %v2528 = vsub.f32 %v1632, %v2277
    %v2529 = vsub.f32 %v1633, %v2279
    %v2530 = vsub.f32 %v1634, %v2281
    %v2531 = vsub.f32 %v1635, %v2283
    %v2532 = vsub.f32 %v1636, %v2285
    %v2533 = vsub.f32 %v1637, %v2287
    %v2534 = vsub.f32 %v1638, %v2289
    %v2535 = vsub.f32 %v1639, %v2291
    %v2536 = vsub.f32 %v1640, %v2293
    %v2537 = vsub.f32 %v1641, %v2295
    %v2538 = vsub.f32 %v1642, %v2297
    %v2539 = vsub.f32 %v1643, %v2299
    %v2540 = vsub.f32 %v1644, %v2301
    %v2541 = vsub.f32 %v1645, %v2303
    %v2542 = vsub.f32 %v1646, %v2305
    %v2543 = vsub.f32 %v1647, %v2307
    %v2544 = vsub.f32 %v1648, %v2309
    %v2545 = vsub.f32 %v1649, %v2311
    %v2546 = vsub.f32 %v1650, %v2313
    %v2547 = vsub.f32 %v1651, %v2315
    %v2548 = vsub.f32 %v1652, %v2317
    %v2549 = vsub.f32 %v1653, %v2319
    %v2550 = vsub.f32 %v1654, %v2321
    %v2551 = vsub.f32 %v1655, %v2323
    %v2552 = vsub.f32 %v1656, %v2325
    %v2553 = vsub.f32 %v1657, %v2327
    %v2554 = vsub.f32 %v1658, %v2329
    %v2555 = vsub.f32 %v1659, %v2331
    %v2556 = vsub.f32 %v1660, %v2333
    %v2557 = vsub.f32 %v1661, %v2335
    %v2558 = vsub.f32 %v1662, %v2337
    %v2559 = vsub.f32 %v1663, %v2339
    %v2560 = vsub.f32 %v1664, %v2341
    %v2561 = vsub.f32 %v1665, %v2343
    %v2562 = vsub.f32 %v1666, %v2345
    %v2563 = vsub.f32 %v1667, %v2347
    %v2564 = vsub.f32 %v1668, %v2349
    %v2565 = vsub.f32 %v1669, %v2351
    %v2566 = vsub.f32 %v1670, %v2353
    %v2567 = vsub.f32 %v1671, %v2355
    %v2568 = vsub.f32 %v1672, %v2357
    %v2569 = vsub.f32 %v1673, %v2359
    %v2570 = vsub.f32 %v1674, %v2361
    %v2571 = vsub.f32 %v1675, %v2363
    %v2572 = vsub.f32 %v1676, %v2365
    %v2573 = vsub.f32 %v1677, %v2367
    %v2574 = vsub.f32 %v1678, %v2369
    %v2575 = vsub.f32 %v1679, %v2371
    %v2576 = vsub.f32 %v1680, %v2373
    %v2577 = vsub.f32 %v1681, %v2375
    %v2578 = vsub.f32 %v1682, %v2377
    %v2579 = vsub.f32 %v1683, %v2379
    %v2580 = vsub.f32 %v1684, %v2381
    %v2581 = vsub.f32 %v1685, %v2383
    %v2582 = vsub.f32 %v1686, %v2385
    %v2583 = vsub.f32 %v1687, %v2387
    %v2584 = vsub.f32 %v1688, %v2389
    %v2585 = vsub.f32 %v1689, %v2391
    %v2586 = vsub.f32 %v1690, %v2393
    %v2587 = vsub.f32 %v1691, %v2395
    %v2588 = vsub.f32 %v1692, %v2397
    %v2589 = vsub.f32 %v1693, %v2399
    %v2590 = vsub.f32 %v1694, %v2401
    %v2591 = vsub.f32 %v1695, %v2403
    %v2592 = vsub.f32 %v1696, %v2405
    %v2593 = vsub.f32 %v1697, %v2407
    %v2594 = vsub.f32 %v1698, %v2409
    %v2595 = vsub.f32 %v1699, %v2411
    %v2596 = vsub.f32 %v1700, %v2413
    %v2597 = vsub.f32 %v1701, %v2415
    %v2598 = vsub.f32 %v1702, %v2417
    %v2599 = vsub.f32 %v1703, %v2419
    %v2600 = vsub.f32 %v1704, %v2421
    %v2601 = vsub.f32 %v1705, %v2423
    %v2602 = vsub.f32 %v1706, %v2425
    %v2603 = vsub.f32 %v1707, %v2427
    %v2604 = vsub.f32 %v1708, %v2429
    %v2605 = vsub.f32 %v1709, %v2431
    %v2606 = vsub.f32 %v1710, %v2433
    %v2607 = vsub.f32 %v1711, %v2435
    %v2608 = vsub.f32 %v1712, %v2437
    %v2609 = vsub.f32 %v1713, %v2439
    %v2610 = vsub.f32 %v1714, %v2441
    %v2611 = vsub.f32 %v1715, %v2443
    %v2612 = vsub.f32 %v1716, %v2445
    %v2613 = vsub.f32 %v1717, %v2447
    %v2614 = vsub.f32 %v1718, %v2449
    %v2615 = vsub.f32 %v1719, %v2451
    %v2616 = vsub.f32 %v1720, %v2453
    %v2617 = vsub.f32 %v1721, %v2455
    %v2618 = vsub.f32 %v1722, %v2457
    %v2619 = vsub.f32 %v1723, %v2459
    %v2620 = vsub.f32 %v1724, %v2461
    %v2621 = vsub.f32 %v1725, %v2463
    %v2622 = vsub.f32 %v1726, %v2465
    %v2623 = vsub.f32 %v1727, %v2467
    %v2624 = vsub.f32 %v1728, %v2469
    %v2625 = vsub.f32 %v1729, %v2471
    %v2626 = vsub.f32 %v1730, %v2473
    %v2627 = vsub.f32 %v1731, %v2475
    %v2628 = vsub.f32 %v1732, %v2477
    %v2629 = vsub.f32 %v1733, %v2479
    %v2630 = vsub.f32 %v1734, %v2481
    %v2631 = vsub.f32 %v1735, %v2483
    %v2632 = vsub.f32 %v1736, %v2485
    %v2633 = vsub.f32 %v1737, %v2487
    %v2634 = vsub.f32 %v1738, %v2489
    %v2635 = vsub.f32 %v1739, %v2491
    %v2636 = vsub.f32 %v1740, %v2493
    %v2637 = vsub.f32 %v1741, %v2495
    %v2638 = vsub.f32 %v1742, %v2497
    %v2639 = vsub.f32 %v1743, %v2499
    %v2640 = vsub.f32 %v1744, %v2501
    %v2641 = vsub.f32 %v1745, %v2503
    %v2642 = vsub.f32 %v1746, %v2505
    %v2643 = vsub.f32 %v1747, %v2507
    %v2644 = vsub.f32 %v1748, %v2509
    %v2645 = vsub.f32 %v1749, %v2511
    %v2646 = vsub.f32 %v1750, %v2513
    %v2647 = vsub.f32 %v1751, %v2515
    %v2648 = vsub.f32 %v1752, %v2517
    %v2649 = vsub.f32 %v1753, %v2519
    %v2650 = vsub.f32 %v1754, %v2521
    %v2651 = vsub.f32 %v1755, %v2523
    %2652 = vst [vmem:[#allocation2] sm:$0xff] %v2524
    %2653 = vst [vmem:[#allocation2 + $0x8] sm:$0xff] %v2525
    %2654 = vst [vmem:[#allocation2 + $0x10] sm:$0xff] %v2526
    %2655 = vst [vmem:[#allocation2 + $0x18] sm:$0xff] %v2527
    %2656 = vst [vmem:[#allocation2 + $0x20] sm:$0xff] %v2528
    %2657 = vst [vmem:[#allocation2 + $0x28] sm:$0xff] %v2529
    %2658 = vst [vmem:[#allocation2 + $0x30] sm:$0xff] %v2530
    %2659 = vst [vmem:[#allocation2 + $0x38] sm:$0xff] %v2531
    %2660 = vst [vmem:[#allocation2 + $0x40] sm:$0xff] %v2532
    %2661 = vst [vmem:[#allocation2 + $0x48] sm:$0xff] %v2533
    %2662 = vst [vmem:[#allocation2 + $0x50] sm:$0xff] %v2534
    %2663 = vst [vmem:[#allocation2 + $0x58] sm:$0xff] %v2535
    %2664 = vst [vmem:[#allocation2 + $0x60] sm:$0xff] %v2536
    %2665 = vst [vmem:[#allocation2 + $0x68] sm:$0xff] %v2537
    %2666 = vst [vmem:[#allocation2 + $0x70] sm:$0xff] %v2538
    %2667 = vst [vmem:[#allocation2 + $0x78] sm:$0xff] %v2539
    %2668 = vst [vmem:[#allocation2 + $0x80] sm:$0xff] %v2540
    %2669 = vst [vmem:[#allocation2 + $0x88] sm:$0xff] %v2541
    %2670 = vst [vmem:[#allocation2 + $0x90] sm:$0xff] %v2542
    %2671 = vst [vmem:[#allocation2 + $0x98] sm:$0xff] %v2543
    %2672 = vst [vmem:[#allocation2 + $0xa0] sm:$0xff] %v2544
    %2673 = vst [vmem:[#allocation2 + $0xa8] sm:$0xff] %v2545
    %2674 = vst [vmem:[#allocation2 + $0xb0] sm:$0xff] %v2546
    %2675 = vst [vmem:[#allocation2 + $0xb8] sm:$0xff] %v2547
    %2676 = vst [vmem:[#allocation2 + $0xc0] sm:$0xff] %v2548
    %2677 = vst [vmem:[#allocation2 + $0xc8] sm:$0xff] %v2549
    %2678 = vst [vmem:[#allocation2 + $0xd0] sm:$0xff] %v2550
    %2679 = vst [vmem:[#allocation2 + $0xd8] sm:$0xff] %v2551
    %2680 = vst [vmem:[#allocation2 + $0xe0] sm:$0xff] %v2552
    %2681 = vst [vmem:[#allocation2 + $0xe8] sm:$0xff] %v2553
    %2682 = vst [vmem:[#allocation2 + $0xf0] sm:$0xff] %v2554
    %2683 = vst [vmem:[#allocation2 + $0xf8] sm:$0xff] %v2555
    %2684 = vst [vmem:[#allocation2 + $0x100] sm:$0xff] %v2556
    %2685 = vst [vmem:[#allocation2 + $0x108] sm:$0xff] %v2557
    %2686 = vst [vmem:[#allocation2 + $0x110] sm:$0xff] %v2558
    %2687 = vst [vmem:[#allocation2 + $0x118] sm:$0xff] %v2559
    %2688 = vst [vmem:[#allocation2 + $0x120] sm:$0xff] %v2560
    %2689 = vst [vmem:[#allocation2 + $0x128] sm:$0xff] %v2561
    %2690 = vst [vmem:[#allocation2 + $0x130] sm:$0xff] %v2562
    %2691 = vst [vmem:[#allocation2 + $0x138] sm:$0xff] %v2563
    %2692 = vst [vmem:[#allocation2 + $0x140] sm:$0xff] %v2564
    %2693 = vst [vmem:[#allocation2 + $0x148] sm:$0xff] %v2565
    %2694 = vst [vmem:[#allocation2 + $0x150] sm:$0xff] %v2566
    %2695 = vst [vmem:[#allocation2 + $0x158] sm:$0xff] %v2567
    %2696 = vst [vmem:[#allocation2 + $0x160] sm:$0xff] %v2568
    %2697 = vst [vmem:[#allocation2 + $0x168] sm:$0xff] %v2569
    %2698 = vst [vmem:[#allocation2 + $0x170] sm:$0xff] %v2570
    %2699 = vst [vmem:[#allocation2 + $0x178] sm:$0xff] %v2571
    %2700 = vst [vmem:[#allocation2 + $0x180] sm:$0xff] %v2572
    %2701 = vst [vmem:[#allocation2 + $0x188] sm:$0xff] %v2573
    %2702 = vst [vmem:[#allocation2 + $0x190] sm:$0xff] %v2574
    %2703 = vst [vmem:[#allocation2 + $0x198] sm:$0xff] %v2575
    %2704 = vst [vmem:[#allocation2 + $0x1a0] sm:$0xff] %v2576
    %2705 = vst [vmem:[#allocation2 + $0x1a8] sm:$0xff] %v2577
    %2706 = vst [vmem:[#allocation2 + $0x1b0] sm:$0xff] %v2578
    %2707 = vst [vmem:[#allocation2 + $0x1b8] sm:$0xff] %v2579
    %2708 = vst [vmem:[#allocation2 + $0x1c0] sm:$0xff] %v2580
    %2709 = vst [vmem:[#allocation2 + $0x1c8] sm:$0xff] %v2581
    %2710 = vst [vmem:[#allocation2 + $0x1d0] sm:$0xff] %v2582
    %2711 = vst [vmem:[#allocation2 + $0x1d8] sm:$0xff] %v2583
    %2712 = vst [vmem:[#allocation2 + $0x1e0] sm:$0xff] %v2584
    %2713 = vst [vmem:[#allocation2 + $0x1e8] sm:$0xff] %v2585
    %2714 = vst [vmem:[#allocation2 + $0x1f0] sm:$0xff] %v2586
    %2715 = vst [vmem:[#allocation2 + $0x1f8] sm:$0xff] %v2587
    %2716 = vst [vmem:[#allocation2 + $0x200] sm:$0xff] %v2588
    %2717 = vst [vmem:[#allocation2 + $0x208] sm:$0xff] %v2589
    %2718 = vst [vmem:[#allocation2 + $0x210] sm:$0xff] %v2590
    %2719 = vst [vmem:[#allocation2 + $0x218] sm:$0xff] %v2591
    %2720 = vst [vmem:[#allocation2 + $0x220] sm:$0xff] %v2592
    %2721 = vst [vmem:[#allocation2 + $0x228] sm:$0xff] %v2593
    %2722 = vst [vmem:[#allocation2 + $0x230] sm:$0xff] %v2594
    %2723 = vst [vmem:[#allocation2 + $0x238] sm:$0xff] %v2595
    %2724 = vst [vmem:[#allocation2 + $0x240] sm:$0xff] %v2596
    %2725 = vst [vmem:[#allocation2 + $0x248] sm:$0xff] %v2597
    %2726 = vst [vmem:[#allocation2 + $0x250] sm:$0xff] %v2598
    %2727 = vst [vmem:[#allocation2 + $0x258] sm:$0xff] %v2599
    %2728 = vst [vmem:[#allocation2 + $0x260] sm:$0xff] %v2600
    %2729 = vst [vmem:[#allocation2 + $0x268] sm:$0xff] %v2601
    %2730 = vst [vmem:[#allocation2 + $0x270] sm:$0xff] %v2602
    %2731 = vst [vmem:[#allocation2 + $0x278] sm:$0xff] %v2603
    %2732 = vst [vmem:[#allocation2 + $0x280] sm:$0xff] %v2604
    %2733 = vst [vmem:[#allocation2 + $0x288] sm:$0xff] %v2605
    %2734 = vst [vmem:[#allocation2 + $0x290] sm:$0xff] %v2606
    %2735 = vst [vmem:[#allocation2 + $0x298] sm:$0xff] %v2607
    %2736 = vst [vmem:[#allocation2 + $0x2a0] sm:$0xff] %v2608
    %2737 = vst [vmem:[#allocation2 + $0x2a8] sm:$0xff] %v2609
    %2738 = vst [vmem:[#allocation2 + $0x2b0] sm:$0xff] %v2610
    %2739 = vst [vmem:[#allocation2 + $0x2b8] sm:$0xff] %v2611
    %2740 = vst [vmem:[#allocation2 + $0x2c0] sm:$0xff] %v2612
    %2741 = vst [vmem:[#allocation2 + $0x2c8] sm:$0xff] %v2613
    %2742 = vst [vmem:[#allocation2 + $0x2d0] sm:$0xff] %v2614
    %2743 = vst [vmem:[#allocation2 + $0x2d8] sm:$0xff] %v2615
    %2744 = vst [vmem:[#allocation2 + $0x2e0] sm:$0xff] %v2616
    %2745 = vst [vmem:[#allocation2 + $0x2e8] sm:$0xff] %v2617
    %2746 = vst [vmem:[#allocation2 + $0x2f0] sm:$0xff] %v2618
    %2747 = vst [vmem:[#allocation2 + $0x2f8] sm:$0xff] %v2619
    %2748 = vst [vmem:[#allocation2 + $0x300] sm:$0xff] %v2620
    %2749 = vst [vmem:[#allocation2 + $0x308] sm:$0xff] %v2621
    %2750 = vst [vmem:[#allocation2 + $0x310] sm:$0xff] %v2622
    %2751 = vst [vmem:[#allocation2 + $0x318] sm:$0xff] %v2623
    %2752 = vst [vmem:[#allocation2 + $0x320] sm:$0xff] %v2624
    %2753 = vst [vmem:[#allocation2 + $0x328] sm:$0xff] %v2625
    %2754 = vst [vmem:[#allocation2 + $0x330] sm:$0xff] %v2626
    %2755 = vst [vmem:[#allocation2 + $0x338] sm:$0xff] %v2627
    %2756 = vst [vmem:[#allocation2 + $0x340] sm:$0xff] %v2628
    %2757 = vst [vmem:[#allocation2 + $0x348] sm:$0xff] %v2629
    %2758 = vst [vmem:[#allocation2 + $0x350] sm:$0xff] %v2630
    %2759 = vst [vmem:[#allocation2 + $0x358] sm:$0xff] %v2631
    %2760 = vst [vmem:[#allocation2 + $0x360] sm:$0xff] %v2632
    %2761 = vst [vmem:[#allocation2 + $0x368] sm:$0xff] %v2633
    %2762 = vst [vmem:[#allocation2 + $0x370] sm:$0xff] %v2634
    %2763 = vst [vmem:[#allocation2 + $0x378] sm:$0xff] %v2635
    %2764 = vst [vmem:[#allocation2 + $0x380] sm:$0xff] %v2636
    %2765 = vst [vmem:[#allocation2 + $0x388] sm:$0xff] %v2637
    %2766 = vst [vmem:[#allocation2 + $0x390] sm:$0xff] %v2638
    %2767 = vst [vmem:[#allocation2 + $0x398] sm:$0xff] %v2639
    %2768 = vst [vmem:[#allocation2 + $0x3a0] sm:$0xff] %v2640
    %2769 = vst [vmem:[#allocation2 + $0x3a8] sm:$0xff] %v2641
    %2770 = vst [vmem:[#allocation2 + $0x3b0] sm:$0xff] %v2642
    %2771 = vst [vmem:[#allocation2 + $0x3b8] sm:$0xff] %v2643
    %2772 = vst [vmem:[#allocation2 + $0x3c0] sm:$0xff] %v2644
    %2773 = vst [vmem:[#allocation2 + $0x3c8] sm:$0xff] %v2645
    %2774 = vst [vmem:[#allocation2 + $0x3d0] sm:$0xff] %v2646
    %2775 = vst [vmem:[#allocation2 + $0x3d8] sm:$0xff] %v2647
    %2776 = vst [vmem:[#allocation2 + $0x3e0] sm:$0xff] %v2648
    %2777 = vst [vmem:[#allocation2 + $0x3e8] sm:$0xff] %v2649
    %2778 = vst [vmem:[#allocation2 + $0x3f0] sm:$0xff] %v2650
    %2779 = vst [vmem:[#allocation2 + $0x3f8] sm:$0xff] %v2651
    // Predicated region
    $region14: #{tpu_custom_call.1} parent=1 // pred_check
      _
    $region15: #{tpu_custom_call.1} parent=1 // pred_check_branch
      %2781 = sbr.rel (0) target = $region17
    $region16: #{tpu_custom_call.1} parent=1 // pred_region
      %s2783 = ssub.s32 16384, 16384
      %2784 = vsyncadd [#allocation3], %s2783
      %s2785 = sshll.u32 [#allocation2], 4
      %s2786 = int_to_ptr.vmem [resolvable:$true] %s2785
      %2791 = dma.vmem_to_hbm [thread:$0]  %s2786, 16384, %s3, [#allocation3], 128, 128, 8
    $region17: #{tpu_custom_call.1} parent=1 // pred_fallthru
      _
    // Predicated region
    $region18: #{tpu_custom_call.1} parent=1 // pred_check
      _
    $region19: #{tpu_custom_call.1} parent=1 // pred_check_branch
      %2793 = sbr.rel (0) target = $region21
    $region20: #{tpu_custom_call.1} parent=1 // pred_region
      %2794 = dma.done [#allocation3], 16384
    $region21: #{tpu_custom_call.1} parent=1 // pred_fallthru
      _
    %2795 = vsyncpa [#allocation3], 1

</llo_original>
